<compile_context>
chip_gen: v5e
topology: v5e:2x2
jax: 0.10.0
libtpu: 0.0.40
codegen_flags: <defaults>
</compile_context>

<pallas_src>
import jax
import jax.numpy as jnp
from jax.experimental import pallas as pl
from jax.experimental.pallas import tpu as pltpu

C = 768                # channels (hard-coded by the module's .view(768, 40*4, 4))
N_TILES = 40           # feature tiles folded into GeM
HW = 4 * 4
S = N_TILES * HW       # 640 pooled positions
R = 8                  # SE reduction ratio
C_R = C // R           # 96  (true bottleneck width)
C_R_PAD = 128          # lane-padded bottleneck width
EPS = 1e-6             # GeM eps

BLK = 160              # rows of x per grid step (640 = 4 * 160)
NSTEPS = S // BLK      # 4 grid steps
SUB = 80               # rows per in-kernel accumulation chunk (bounds vregs)
NSUB = BLK // SUB      # 2


def _make_mil_head_kernel(p):
    """Build the fused head kernel with the GeM exponent baked in statically."""
    p = float(p)
    inv_p = 1.0 / p
    cube = (p == 3.0)

    def kernel(x_ref, w1_ref, b1_ref, w2_ref, b2_ref, wc_ref, bc_ref,
               out_ref, acc_ref):
        step = pl.program_id(0)

        @pl.when(step == 0)
        def _init():
            acc_ref[...] = jnp.zeros_like(acc_ref)

        # ---- streamed GeM accumulation: sum_s clamp(x, eps)^p -> (1, C) ----
        for ci in range(NSUB):                       # static chunks of SUB rows
            xc = x_ref[ci * SUB:(ci + 1) * SUB, :].astype(jnp.float32)
            xc = jnp.maximum(xc, EPS)                # clamp(min=eps) > 0
            if cube:
                xp = xc * xc * xc                    # p == 3: pure VPU multiplies
            else:
                xp = jnp.exp(p * jnp.log(xc))        # generic pow (EUP path)
            acc_ref[...] += jnp.sum(xp, axis=0, keepdims=True)

        # ---- finalize on the last block: GeM root, SE gate, classifier ----
        @pl.when(step == pl.num_programs(0) - 1)
        def _finalize():
            pooled = acc_ref[...] * (1.0 / S)                 # mean over all S
            feat = jnp.exp(jnp.log(pooled) * inv_p)           # pooled^(1/p), (1, C)

            # SEBlock(768, r=8) with lane-padded bottleneck (pads are zero)
            h1 = jnp.dot(feat, w1_ref[...],
                         preferred_element_type=jnp.float32) + b1_ref[...]
            h1 = jnp.maximum(h1, 0.0)                         # (1, 128) relu
            gate = jnp.dot(h1, w2_ref[...],
                           preferred_element_type=jnp.float32) + b2_ref[...]
            gate = jax.nn.sigmoid(gate)                       # (1, C)
            se = feat * gate                                  # (1, C)

            # Classifier Linear(768, 1) as a lane reduction (no M=1 MXU pass)
            logit = jnp.sum(se * wc_ref[...], axis=-1, keepdims=True) + bc_ref[...]
            out_ref[...] = jax.nn.sigmoid(logit)              # (1, 1)

    return kernel


def mil_pretrained_cnn_forward(x1_nhwc, kparams, p=3.0):
    """x1_nhwc: backbone 'x1' feature map in NHWC, shape (40, 4, 4, 768).

    NHWC is requested from the backbone so the (S, C) flattening below is a
    free view; GeM pools over all spatial positions, so the row order does not
    affect the result (matches the PyTorch NCHW permute/view semantics).
    """
    n, h, w, c = x1_nhwc.shape
    assert c == C and n * h * w == S
    x_sc = x1_nhwc.reshape(n * h * w, c)         # free reshape, no XLA transpose

    const = lambda i: (0, 0)
    grid_spec = pltpu.PrefetchScalarGridSpec(
        num_scalar_prefetch=0,
        grid=(NSTEPS,),
        in_specs=[
            pl.BlockSpec((BLK, C), lambda i: (i, 0)),   # x row blocks (pipelined)
            pl.BlockSpec((C, C_R_PAD), const),          # w1 (padded, resident)
            pl.BlockSpec((1, C_R_PAD), const),          # b1 (padded)
            pl.BlockSpec((C_R_PAD, C), const),          # w2 (padded, resident)
            pl.BlockSpec((1, C), const),                # b2
            pl.BlockSpec((1, C), const),                # wc stored as a row
            pl.BlockSpec((1, 1), const),                # bc
        ],
        out_specs=pl.BlockSpec((1, 1), const),
        scratch_shapes=[pltpu.VMEM((1, C), jnp.float32)],   # GeM accumulator
    )
    return pl.pallas_call(
        _make_mil_head_kernel(p),
        out_shape=jax.ShapeDtypeStruct((1, 1), jnp.float32),
        grid_spec=grid_spec,
        compiler_params=pltpu.CompilerParams(
            dimension_semantics=("arbitrary",)),        # reduction over row blocks
    )(x_sc, kparams["w1"], kparams["b1"], kparams["w2"], kparams["b2"],
      kparams["wc"], kparams["bc"])


def init_params(key):
    """PyTorch-Linear-style init (uniform +/- 1/sqrt(fan_in)), true shapes."""
    k1w, k1b, k2w, k2b, kcw, kcb = jax.random.split(key, 6)

    def lin(kw, kb, fan_in, fan_out):
        bound = 1.0 / (fan_in ** 0.5)
        w = jax.random.uniform(kw, (fan_in, fan_out), jnp.float32, -bound, bound)
        b = jax.random.uniform(kb, (1, fan_out), jnp.float32, -bound, bound)
        return w, b

    w1, b1 = lin(k1w, k1b, C, C_R)      # SEBlock.linear_1: 768 -> 96
    w2, b2 = lin(k2w, k2b, C_R, C)      # SEBlock.linear_2: 96 -> 768
    wc, bc = lin(kcw, kcb, C, 1)        # Classifier: 768 -> 1
    return dict(w1=w1, b1=b1, w2=w2, b2=b2, wc=wc, bc=bc)


def pad_params(raw):
    """Kernel-side layout: zero-pad SE bottleneck 96->128 (exact) and store the
    classifier weight as a lane-dense (1, 768) row."""
    w1 = jnp.zeros((C, C_R_PAD), jnp.float32).at[:, :C_R].set(raw["w1"])
    b1 = jnp.zeros((1, C_R_PAD), jnp.float32).at[:, :C_R].set(raw["b1"])
    w2 = jnp.zeros((C_R_PAD, C), jnp.float32).at[:C_R, :].set(raw["w2"])
    return dict(w1=w1, b1=b1, w2=w2, b2=raw["b2"],
                wc=raw["wc"].reshape(1, C), bc=raw["bc"])


def reference_forward(x1_nhwc, raw, p=3.0, eps=EPS):
    """Pure-JAX reference matching the PyTorch module semantics."""
    x_sc = x1_nhwc.reshape(-1, C).astype(jnp.float32)
    pooled = jnp.mean(jnp.maximum(x_sc, eps) ** p, axis=0, keepdims=True)
    feat = pooled ** (1.0 / p)
    h1 = jax.nn.relu(feat @ raw["w1"] + raw["b1"])
    gate = jax.nn.sigmoid(h1 @ raw["w2"] + raw["b2"])
    se = feat * gate
    return jax.nn.sigmoid(se @ raw["wc"] + raw["bc"])


if __name__ == "__main__":
    key = jax.random.PRNGKey(0)
    k_x, k_p = jax.random.split(key)

    # TODO(synk): feature_extractor_part1 (p_model) is an external pretrained
    # backbone with unknown architecture; synthesize its 'x1' output here (in
    # NHWC so the (S, C) view is free).  The `tab` forward() arg is unused.
    x1_nhwc = jax.random.normal(k_x, (N_TILES, 4, 4, C), dtype=jnp.float32)

    raw = init_params(k_p)
    kparams = pad_params(raw)

    out = mil_pretrained_cnn_forward(x1_nhwc, kparams, p=3.0)
    out = jax.block_until_ready(out)

    assert out.shape == (1, 1) and out.dtype == jnp.float32
    ref = reference_forward(x1_nhwc, raw)
    assert jnp.allclose(out, ref, rtol=1e-4, atol=1e-5), (out, ref)
    assert bool(jnp.all((out >= 0.0) & (out <= 1.0)))
    print("KERNEL_OK")
</pallas_src>

<mosaic_0001>
module attributes {stable_mosaic.version = 11 : i64} {
  func.func @kernel(%arg0: i32, %arg1: memref<160x768xf32, #tpu.memory_space<vmem>>, %arg2: memref<768x128xf32, #tpu.memory_space<vmem>>, %arg3: memref<1x128xf32, #tpu.memory_space<vmem>>, %arg4: memref<128x768xf32, #tpu.memory_space<vmem>>, %arg5: memref<1x768xf32, #tpu.memory_space<vmem>>, %arg6: memref<1x768xf32, #tpu.memory_space<vmem>>, %arg7: memref<1x1xf32, #tpu.memory_space<vmem>>, %arg8: memref<1x1xf32, #tpu.memory_space<vmem>>, %arg9: memref<1x768xf32, #tpu.memory_space<vmem>>) attributes {dimension_semantics = [#tpu.dimension_semantics<arbitrary>], iteration_bounds = array<i64: 4>, scalar_prefetch = 0 : i64, scratch_operands = 1 : i64, tpu.core_type = #tpu.core_type<tc>, window_params = [{transform_indices = @transform_0, window_bounds = array<i64: 160, 768>}, {pipeline_mode = #tpu.pipeline_mode<synchronous>, transform_indices = @transform_1, window_bounds = array<i64: 768, 128>}, {pipeline_mode = #tpu.pipeline_mode<synchronous>, transform_indices = @transform_2, window_bounds = array<i64: 1, 128>}, {pipeline_mode = #tpu.pipeline_mode<synchronous>, transform_indices = @transform_3, window_bounds = array<i64: 128, 768>}, {pipeline_mode = #tpu.pipeline_mode<synchronous>, transform_indices = @transform_4, window_bounds = array<i64: 1, 768>}, {pipeline_mode = #tpu.pipeline_mode<synchronous>, transform_indices = @transform_5, window_bounds = array<i64: 1, 768>}, {pipeline_mode = #tpu.pipeline_mode<synchronous>, transform_indices = @transform_6, window_bounds = array<i64: 1, 1>}, {pipeline_mode = #tpu.pipeline_mode<synchronous>, transform_indices = @transform_7, window_bounds = array<i64: 1, 1>}]} {
    %c0_i32 = arith.constant 0 : i32
    %0 = arith.cmpi eq, %arg0, %c0_i32 : i32
    %1 = arith.extui %0 : i1 to i32
    %c0_i32_0 = arith.constant 0 : i32
    %2 = arith.cmpi ne, %1, %c0_i32_0 : i32
    scf.if %2 {
      %cst_15 = arith.constant 0.000000e+00 : f32
      %26 = vector.broadcast %cst_15 : f32 to vector<1x768xf32>
      %c0_16 = arith.constant 0 : index
      %c0_17 = arith.constant 0 : index
      %27 = vector.load %arg9[%c0_16, %c0_17] : memref<1x768xf32, #tpu.memory_space<vmem>>, vector<1x768xf32>
      tpu.vector_store %arg9[%c0_16, %c0_17], %26 {strides = array<i32>} : memref<1x768xf32, #tpu.memory_space<vmem>>, vector<1x768xf32>,
    } else {
    }
    %c0 = arith.constant 0 : index
    %c0_1 = arith.constant 0 : index
    %3 = vector.load %arg1[%c0, %c0_1] : memref<160x768xf32, #tpu.memory_space<vmem>>, vector<80x768xf32>
    %cst = arith.constant 9.99999997E-7 : f32
    %4 = vector.broadcast %cst : f32 to vector<80x768xf32>
    %5 = arith.maximumf %3, %4 : vector<80x768xf32>
    %6 = arith.mulf %5, %5 : vector<80x768xf32>
    %7 = arith.mulf %6, %5 : vector<80x768xf32>
    %c0_2 = arith.constant 0 : index
    %c0_3 = arith.constant 0 : index
    %8 = vector.load %arg9[%c0_2, %c0_3] : memref<1x768xf32, #tpu.memory_space<vmem>>, vector<1x768xf32>
    %cst_4 = arith.constant dense<0.000000e+00> : vector<768xf32>
    %9 = vector.multi_reduction <add>, %7, %cst_4 [0] : vector<80x768xf32> to vector<768xf32>
    %10 = vector.shape_cast %9 : vector<768xf32> to vector<1x768xf32>
    %11 = arith.addf %8, %10 : vector<1x768xf32>
    %c0_5 = arith.constant 0 : index
    %c0_6 = arith.constant 0 : index
    %12 = vector.load %arg9[%c0_5, %c0_6] : memref<1x768xf32, #tpu.memory_space<vmem>>, vector<1x768xf32>
    tpu.vector_store %arg9[%c0_5, %c0_6], %11 {strides = array<i32>} : memref<1x768xf32, #tpu.memory_space<vmem>>, vector<1x768xf32>,
    %c80 = arith.constant 80 : index
    %c0_7 = arith.constant 0 : index
    %13 = vector.load %arg1[%c80, %c0_7] : memref<160x768xf32, #tpu.memory_space<vmem>>, vector<80x768xf32>
    %cst_8 = arith.constant 9.99999997E-7 : f32
    %14 = vector.broadcast %cst_8 : f32 to vector<80x768xf32>
    %15 = arith.maximumf %13, %14 : vector<80x768xf32>
    %16 = arith.mulf %15, %15 : vector<80x768xf32>
    %17 = arith.mulf %16, %15 : vector<80x768xf32>
    %c0_9 = arith.constant 0 : index
    %c0_10 = arith.constant 0 : index
    %18 = vector.load %arg9[%c0_9, %c0_10] : memref<1x768xf32, #tpu.memory_space<vmem>>, vector<1x768xf32>
    %cst_11 = arith.constant dense<0.000000e+00> : vector<768xf32>
    %19 = vector.multi_reduction <add>, %17, %cst_11 [0] : vector<80x768xf32> to vector<768xf32>
    %20 = vector.shape_cast %19 : vector<768xf32> to vector<1x768xf32>
    %21 = arith.addf %18, %20 : vector<1x768xf32>
    %c0_12 = arith.constant 0 : index
    %c0_13 = arith.constant 0 : index
    %22 = vector.load %arg9[%c0_12, %c0_13] : memref<1x768xf32, #tpu.memory_space<vmem>>, vector<1x768xf32>
    tpu.vector_store %arg9[%c0_12, %c0_13], %21 {strides = array<i32>} : memref<1x768xf32, #tpu.memory_space<vmem>>, vector<1x768xf32>,
    %c3_i32 = arith.constant 3 : i32
    %23 = arith.cmpi eq, %arg0, %c3_i32 : i32
    %24 = arith.extui %23 : i1 to i32
    %c0_i32_14 = arith.constant 0 : i32
    %25 = arith.cmpi ne, %24, %c0_i32_14 : i32
    scf.if %25 {
      %c0_15 = arith.constant 0 : index
      %c0_16 = arith.constant 0 : index
      %26 = vector.load %arg9[%c0_15, %c0_16] : memref<1x768xf32, #tpu.memory_space<vmem>>, vector<1x768xf32>
      %cst_17 = arith.constant 1.562500e-03 : f32
      %27 = vector.broadcast %cst_17 : f32 to vector<1x768xf32>
      %28 = arith.mulf %26, %27 : vector<1x768xf32>
      %29 = math.log %28 : vector<1x768xf32>
      %cst_18 = arith.constant 0.333333343 : f32
      %30 = vector.broadcast %cst_18 : f32 to vector<1x768xf32>
      %31 = arith.mulf %29, %30 : vector<1x768xf32>
      %32 = math.exp %31 : vector<1x768xf32>
      %c0_19 = arith.constant 0 : index
      %c0_20 = arith.constant 0 : index
      %33 = vector.load %arg2[%c0_19, %c0_20] : memref<768x128xf32, #tpu.memory_space<vmem>>, vector<768x128xf32>
      %cst_21 = arith.constant dense<0.000000e+00> : vector<1x128xf32>
      %34 = tpu.matmul %32, %33, %cst_21 {dimension_numbers = #tpu.dot_dimension_numbers<[1], [0], [0], [1], [0, 0, 1, 1], [], []>} : vector<1x768xf32>, vector<768x128xf32>, vector<1x128xf32> -> vector<1x128xf32>
      %c0_22 = arith.constant 0 : index
      %c0_23 = arith.constant 0 : index
      %35 = vector.load %arg3[%c0_22, %c0_23] : memref<1x128xf32, #tpu.memory_space<vmem>>, vector<1x128xf32>
      %36 = arith.addf %34, %35 : vector<1x128xf32>
      %cst_24 = arith.constant 0.000000e+00 : f32
      %37 = vector.broadcast %cst_24 : f32 to vector<1x128xf32>
      %38 = arith.maximumf %36, %37 : vector<1x128xf32>
      %c0_25 = arith.constant 0 : index
      %c0_26 = arith.constant 0 : index
      %39 = vector.load %arg4[%c0_25, %c0_26] : memref<128x768xf32, #tpu.memory_space<vmem>>, vector<128x768xf32>
      %cst_27 = arith.constant dense<0.000000e+00> : vector<1x768xf32>
      %40 = tpu.matmul %38, %39, %cst_27 {dimension_numbers = #tpu.dot_dimension_numbers<[1], [0], [0], [1], [0, 0, 1, 1], [], []>} : vector<1x128xf32>, vector<128x768xf32>, vector<1x768xf32> -> vector<1x768xf32>
      %c0_28 = arith.constant 0 : index
      %c0_29 = arith.constant 0 : index
      %41 = vector.load %arg5[%c0_28, %c0_29] : memref<1x768xf32, #tpu.memory_space<vmem>>, vector<1x768xf32>
      %42 = arith.addf %40, %41 : vector<1x768xf32>
      %43 = arith.negf %42 : vector<1x768xf32>
      %44 = math.exp %43 : vector<1x768xf32>
      %cst_30 = arith.constant 1.000000e+00 : f32
      %45 = vector.broadcast %cst_30 : f32 to vector<1x768xf32>
      %46 = arith.addf %45, %44 : vector<1x768xf32>
      %47 = arith.divf %45, %46 : vector<1x768xf32>
      %48 = arith.mulf %32, %47 : vector<1x768xf32>
      %c0_31 = arith.constant 0 : index
      %c0_32 = arith.constant 0 : index
      %49 = vector.load %arg6[%c0_31, %c0_32] : memref<1x768xf32, #tpu.memory_space<vmem>>, vector<1x768xf32>
      %50 = arith.mulf %48, %49 : vector<1x768xf32>
      %cst_33 = arith.constant dense<0.000000e+00> : vector<1xf32>
      %51 = vector.multi_reduction <add>, %50, %cst_33 [1] : vector<1x768xf32> to vector<1xf32>
      %52 = vector.shape_cast %51 : vector<1xf32> to vector<1x1xf32>
      %c0_34 = arith.constant 0 : index
      %c0_35 = arith.constant 0 : index
      %53 = vector.load %arg7[%c0_34, %c0_35] : memref<1x1xf32, #tpu.memory_space<vmem>>, vector<1x1xf32>
      %54 = arith.addf %52, %53 : vector<1x1xf32>
      %55 = arith.negf %54 : vector<1x1xf32>
      %56 = math.exp %55 : vector<1x1xf32>
      %cst_36 = arith.constant 1.000000e+00 : f32
      %57 = vector.broadcast %cst_36 : f32 to vector<1x1xf32>
      %58 = arith.addf %57, %56 : vector<1x1xf32>
      %59 = arith.divf %57, %58 : vector<1x1xf32>
      %c0_37 = arith.constant 0 : index
      %c0_38 = arith.constant 0 : index
      %60 = vector.load %arg8[%c0_37, %c0_38] : memref<1x1xf32, #tpu.memory_space<vmem>>, vector<1x1xf32>
      tpu.vector_store %arg8[%c0_37, %c0_38], %59 {strides = array<i32>} : memref<1x1xf32, #tpu.memory_space<vmem>>, vector<1x1xf32>,
    } else {
    }
    return
  }
  func.func @transform_0(%arg0: i32) -> (i32, i32) {
    %c0_i32 = arith.constant 0 : i32
    %c0_i32_0 = arith.constant 0 : i32
    return %arg0, %c0_i32 : i32, i32
  }
  func.func @transform_1(%arg0: i32) -> (i32, i32) {
    %c0_i32 = arith.constant 0 : i32
    %c0_i32_0 = arith.constant 0 : i32
    %c0_i32_1 = arith.constant 0 : i32
    return %c0_i32, %c0_i32_0 : i32, i32
  }
  func.func @transform_2(%arg0: i32) -> (i32, i32) {
    %c0_i32 = arith.constant 0 : i32
    %c0_i32_0 = arith.constant 0 : i32
    %c0_i32_1 = arith.constant 0 : i32
    return %c0_i32, %c0_i32_0 : i32, i32
  }
  func.func @transform_3(%arg0: i32) -> (i32, i32) {
    %c0_i32 = arith.constant 0 : i32
    %c0_i32_0 = arith.constant 0 : i32
    %c0_i32_1 = arith.constant 0 : i32
    return %c0_i32, %c0_i32_0 : i32, i32
  }
  func.func @transform_4(%arg0: i32) -> (i32, i32) {
    %c0_i32 = arith.constant 0 : i32
    %c0_i32_0 = arith.constant 0 : i32
    %c0_i32_1 = arith.constant 0 : i32
    return %c0_i32, %c0_i32_0 : i32, i32
  }
  func.func @transform_5(%arg0: i32) -> (i32, i32) {
    %c0_i32 = arith.constant 0 : i32
    %c0_i32_0 = arith.constant 0 : i32
    %c0_i32_1 = arith.constant 0 : i32
    return %c0_i32, %c0_i32_0 : i32, i32
  }
  func.func @transform_6(%arg0: i32) -> (i32, i32) {
    %c0_i32 = arith.constant 0 : i32
    %c0_i32_0 = arith.constant 0 : i32
    %c0_i32_1 = arith.constant 0 : i32
    return %c0_i32, %c0_i32_0 : i32, i32
  }
  func.func @transform_7(%arg0: i32) -> (i32, i32) {
    %c0_i32 = arith.constant 0 : i32
    %c0_i32_0 = arith.constant 0 : i32
    %c0_i32_1 = arith.constant 0 : i32
    return %c0_i32, %c0_i32_0 : i32, i32
  }
}

</mosaic_0001>

<llo_original>
// kernel: tpu_custom_call.1
$region0: #{tpu_custom_call.1}
  #allocation0 [shape = 'u32[]', space=smem, size = 0x4, offset = 0x4, fixed_abs, tag = 'smem constant byte address 0x4 - core index']
  #allocation1 [shape = 'u32[72,128]{1,0:T(1,128)}', space=vmem, size = 0x9000, scoped, tag = 'internal scratch']
  #allocation2 [shape = 'f32[1,768]{1,0:T(1,128)}', space=vmem, size = 0xc00, scoped, tag = 'scratch operand']
  #allocation3 [shape = 'f32[1,1]{1,0:T(1,128)S(1)}', space=vmem, size = 0x200, scoped, tag = 'scoped memory for tpu_custom_call.1']
  %s0 = inlined_call_operand.hbm [shape: f32[640,768], index: 0, kind: input, shape index: {}]
  %s1 = inlined_call_operand.hbm [shape: f32[768,128], index: 1, kind: input, shape index: {}]
  %s2 = inlined_call_operand.hbm [shape: f32[1,128], index: 2, kind: input, shape index: {}]
  %s3 = inlined_call_operand.hbm [shape: f32[128,768], index: 3, kind: input, shape index: {}]
  %s4 = inlined_call_operand.hbm [shape: f32[1,768], index: 4, kind: input, shape index: {}]
  %s5 = inlined_call_operand.hbm [shape: f32[1,768], index: 5, kind: input, shape index: {}]
  %s6 = inlined_call_operand.<no memory space> [shape: f32[1,1], index: 6, kind: input, shape index: {}]
  %s7 = inlined_call_operand.hbm [shape: f32[1,1], index: 7, kind: output, shape index: {}]
  %s8 = sld [smem:[#allocation0]]
  $region93: #{tpu_custom_call.1} parent=0
    _
  %s10 = ssub.s32 1, %s8
  %s11 = scalar_select 0, %s10, %s8
  %v12 = vstv %s6
  %13 = vst [vmem:[#allocation3] sm:$0x1] %v12
  $region1: #{tpu_custom_call.1} parent=0
    #allocation4 [shape = 'u8[983040]{0}', space=vmem, size = 0xf0000, scoped, tag = 'input window, operand 0']
    #allocation5 [shape = 's32[2]{0}', space=sflag, size = 0x8, scoped, tag = 'scoped memory for tpu_custom_call.1']
    #allocation6 [shape = 's32[2]{0}', space=sflag, size = 0x8, scoped, tag = 'scoped memory for tpu_custom_call.1']
    #allocation7 [shape = 'u8[393216]{0}', space=vmem, size = 0x60000, scoped, tag = 'input window, operand 1, single buffered']
    #allocation8 [shape = 's32[1]{0}', space=sflag, size = 0x4, scoped, tag = 'scoped memory for tpu_custom_call.1']
    #allocation9 [shape = 'u8[512]{0}', space=vmem, size = 0x400, scoped, tag = 'input window, operand 2, single buffered']
    #allocation10 [shape = 'u8[393216]{0}', space=vmem, size = 0x60000, scoped, tag = 'input window, operand 3, single buffered']
    #allocation11 [shape = 's32[1]{0}', space=sflag, size = 0x4, scoped, tag = 'scoped memory for tpu_custom_call.1']
    #allocation12 [shape = 'u8[3072]{0}', space=vmem, size = 0xc00, scoped, tag = 'input window, operand 4, single buffered']
    #allocation13 [shape = 'u8[3072]{0}', space=vmem, size = 0xc00, scoped, tag = 'input window, operand 5, single buffered']
    #allocation14 [shape = 's32[1]{0}', space=sflag, size = 0x4, scoped, tag = 'scoped memory for tpu_custom_call.1']
    #allocation15 [shape = 'u8[512]{0}', space=vmem, size = 0x400, scoped, tag = 'output window, operand 0, single buffered']
    %14 = vsyncpa [#allocation5], 0
    %s15 = scalar_lea.sflag [#allocation5], 1
    %16 = vsyncpa %s15, 0
    %17 = vsyncpa [#allocation8], 0
    %18 = vsyncpa [#allocation11], 0
    %19 = vsyncpa [#allocation14], 0
    %20 = vsyncpa [#allocation6], 0
    loop: start=0, step=1, limit=6
    $region2: #{tpu_custom_call.1} parent=1 // loop_pre_header
      _
    $region3: #{tpu_custom_call.1} parent=1 // loop_header
      %s22 = sphi 0, %s26
      %p23 = scmp.ge.s32.totalorder %s22, 6
      %s32 = sphi 0, %s34
      %s35 = sphi 0, %s32
      %s36 = sphi 0, %s35
      %s52 = sphi 0, %s36
      %s56 = sphi 0, %s56
      %s58 = sphi 0, %s56
      %s59 = sphi 0, %s58
      %s73 = sphi 0, %s59
      %s77 = sphi 0, %s77
      %s79 = sphi 0, %s77
      %s80 = sphi 0, %s79
      %s94 = sphi 0, %s80
      %s98 = sphi 0, %s98
      %s100 = sphi 0, %s98
      %s101 = sphi 0, %s100
      %s115 = sphi 0, %s101
      %s119 = sphi 0, %s119
      %s121 = sphi 0, %s119
      %s122 = sphi 0, %s121
      %s136 = sphi 0, %s122
      %s140 = sphi 0, %s140
      %s142 = sphi 0, %s140
      %s143 = sphi 0, %s142
      %s157 = sphi 0, %s143
      %s161 = sphi 0, %s161
      %s163 = sphi 0, %s161
      %s164 = sphi 0, %s163
      %s178 = sphi 0, %s164
      %s182 = sphi 0, %s182
      %s184 = sphi 0, %s182
      %s185 = sphi 0, %s184
      %s199 = sphi 0, %s185
    $region4: #{tpu_custom_call.1} parent=1 // loop_header_branch
      %25 = sbr.rel (%p23) target = $region8
    $region5: #{tpu_custom_call.1} parent=1 // loop_body
      %s27 = ssub.s32 %s22, 1
      %s28 = ssub.s32 %s22, 2
      %s29 = sadd.s32 %s22, 1
      %s30 = ssub.s32 %s22, %s29
      %p31 = scmp.eq.s32.totalorder %s30, 0
      %s33 = sadd.s32 %s32, 1
      %s34 = scalar_select %p31, %s32, %s33
      %p37 = pneg %p31
      %p38 = scmp.eq.s32.totalorder %s22, 3
      %p39 = por %p37, %p38
      %p40 = scmp.ne.s32.totalorder %s32, %s35
      %p41 = scmp.eq.s32.totalorder %s22, 0
      %p42 = por %p40, %p41
      %p43 = scmp.ne.s32.totalorder %s32, %s35
      %p44 = scmp.eq.s32.totalorder %s27, 3
      %p45 = por %p43, %p44
      %p46 = scmp.ne.s32.totalorder %s35, %s36
      %p47 = scmp.eq.s32.totalorder %s27, 0
      %p48 = por %p46, %p47
      %p49 = scmp.ne.s32.totalorder %s35, %s36
      %p50 = scmp.eq.s32.totalorder %s28, 3
      %p51 = por %p49, %p50
      %p53 = scmp.ne.s32.totalorder %s36, %s52
      %p54 = scmp.eq.s32.totalorder %s28, 0
      %p55 = por %p53, %p54
      %s57 = sadd.s32 %s56, 1
      %p60 = scmp.eq.s32.totalorder %s22, 3
      %p61 = scmp.ne.s32.totalorder %s56, %s58
      %p62 = scmp.eq.s32.totalorder %s22, 0
      %p63 = por %p61, %p62
      %p64 = scmp.ne.s32.totalorder %s56, %s58
      %p65 = scmp.eq.s32.totalorder %s27, 3
      %p66 = por %p64, %p65
      %p67 = scmp.ne.s32.totalorder %s58, %s59
      %p68 = scmp.eq.s32.totalorder %s27, 0
      %p69 = por %p67, %p68
      %p70 = scmp.ne.s32.totalorder %s58, %s59
      %p71 = scmp.eq.s32.totalorder %s28, 3
      %p72 = por %p70, %p71
      %p74 = scmp.ne.s32.totalorder %s59, %s73
      %p75 = scmp.eq.s32.totalorder %s28, 0
      %p76 = por %p74, %p75
      %s78 = sadd.s32 %s77, 1
      %p81 = scmp.eq.s32.totalorder %s22, 3
      %p82 = scmp.ne.s32.totalorder %s77, %s79
      %p83 = scmp.eq.s32.totalorder %s22, 0
      %p84 = por %p82, %p83
      %p85 = scmp.ne.s32.totalorder %s77, %s79
      %p86 = scmp.eq.s32.totalorder %s27, 3
      %p87 = por %p85, %p86
      %p88 = scmp.ne.s32.totalorder %s79, %s80
      %p89 = scmp.eq.s32.totalorder %s27, 0
      %p90 = por %p88, %p89
      %p91 = scmp.ne.s32.totalorder %s79, %s80
      %p92 = scmp.eq.s32.totalorder %s28, 3
      %p93 = por %p91, %p92
      %p95 = scmp.ne.s32.totalorder %s80, %s94
      %p96 = scmp.eq.s32.totalorder %s28, 0
      %p97 = por %p95, %p96
      %s99 = sadd.s32 %s98, 1
      %p102 = scmp.eq.s32.totalorder %s22, 3
      %p103 = scmp.ne.s32.totalorder %s98, %s100
      %p104 = scmp.eq.s32.totalorder %s22, 0
      %p105 = por %p103, %p104
      %p106 = scmp.ne.s32.totalorder %s98, %s100
      %p107 = scmp.eq.s32.totalorder %s27, 3
      %p108 = por %p106, %p107
      %p109 = scmp.ne.s32.totalorder %s100, %s101
      %p110 = scmp.eq.s32.totalorder %s27, 0
      %p111 = por %p109, %p110
      %p112 = scmp.ne.s32.totalorder %s100, %s101
      %p113 = scmp.eq.s32.totalorder %s28, 3
      %p114 = por %p112, %p113
      %p116 = scmp.ne.s32.totalorder %s101, %s115
      %p117 = scmp.eq.s32.totalorder %s28, 0
      %p118 = por %p116, %p117
      %s120 = sadd.s32 %s119, 1
      %p123 = scmp.eq.s32.totalorder %s22, 3
      %p124 = scmp.ne.s32.totalorder %s119, %s121
      %p125 = scmp.eq.s32.totalorder %s22, 0
      %p126 = por %p124, %p125
      %p127 = scmp.ne.s32.totalorder %s119, %s121
      %p128 = scmp.eq.s32.totalorder %s27, 3
      %p129 = por %p127, %p128
      %p130 = scmp.ne.s32.totalorder %s121, %s122
      %p131 = scmp.eq.s32.totalorder %s27, 0
      %p132 = por %p130, %p131
      %p133 = scmp.ne.s32.totalorder %s121, %s122
      %p134 = scmp.eq.s32.totalorder %s28, 3
      %p135 = por %p133, %p134
      %p137 = scmp.ne.s32.totalorder %s122, %s136
      %p138 = scmp.eq.s32.totalorder %s28, 0
      %p139 = por %p137, %p138
      %s141 = sadd.s32 %s140, 1
      %p144 = scmp.eq.s32.totalorder %s22, 3
      %p145 = scmp.ne.s32.totalorder %s140, %s142
      %p146 = scmp.eq.s32.totalorder %s22, 0
      %p147 = por %p145, %p146
      %p148 = scmp.ne.s32.totalorder %s140, %s142
      %p149 = scmp.eq.s32.totalorder %s27, 3
      %p150 = por %p148, %p149
      %p151 = scmp.ne.s32.totalorder %s142, %s143
      %p152 = scmp.eq.s32.totalorder %s27, 0
      %p153 = por %p151, %p152
      %p154 = scmp.ne.s32.totalorder %s142, %s143
      %p155 = scmp.eq.s32.totalorder %s28, 3
      %p156 = por %p154, %p155
      %p158 = scmp.ne.s32.totalorder %s143, %s157
      %p159 = scmp.eq.s32.totalorder %s28, 0
      %p160 = por %p158, %p159
      %s162 = sadd.s32 %s161, 1
      %p165 = scmp.eq.s32.totalorder %s22, 3
      %p166 = scmp.ne.s32.totalorder %s161, %s163
      %p167 = scmp.eq.s32.totalorder %s22, 0
      %p168 = por %p166, %p167
      %p169 = scmp.ne.s32.totalorder %s161, %s163
      %p170 = scmp.eq.s32.totalorder %s27, 3
      %p171 = por %p169, %p170
      %p172 = scmp.ne.s32.totalorder %s163, %s164
      %p173 = scmp.eq.s32.totalorder %s27, 0
      %p174 = por %p172, %p173
      %p175 = scmp.ne.s32.totalorder %s163, %s164
      %p176 = scmp.eq.s32.totalorder %s28, 3
      %p177 = por %p175, %p176
      %p179 = scmp.ne.s32.totalorder %s164, %s178
      %p180 = scmp.eq.s32.totalorder %s28, 0
      %p181 = por %p179, %p180
      %s183 = sadd.s32 %s182, 1
      %p186 = scmp.eq.s32.totalorder %s22, 3
      %p187 = scmp.ne.s32.totalorder %s182, %s184
      %p188 = scmp.eq.s32.totalorder %s22, 0
      %p189 = por %p187, %p188
      %p190 = scmp.ne.s32.totalorder %s182, %s184
      %p191 = scmp.eq.s32.totalorder %s27, 3
      %p192 = por %p190, %p191
      %p193 = scmp.ne.s32.totalorder %s184, %s185
      %p194 = scmp.eq.s32.totalorder %s27, 0
      %p195 = por %p193, %p194
      %p196 = scmp.ne.s32.totalorder %s184, %s185
      %p197 = scmp.eq.s32.totalorder %s28, 3
      %p198 = por %p196, %p197
      %p200 = scmp.ne.s32.totalorder %s185, %s199
      %p201 = scmp.eq.s32.totalorder %s28, 0
      %p202 = por %p200, %p201
      %p203 = scmp.le.s32.totalorder 1, %s22
      %p204 = scmp.lt.s32.totalorder %s22, 5
      %p205 = pnand %p203, %p204
      %p206 = pneg %p205
      // Predicated region
      $region9: #{tpu_custom_call.1} parent=5 // pred_check
        _
      $region10: #{tpu_custom_call.1} parent=5 // pred_check_branch
        %208 = sbr.rel (%p205) target = $region12
      $region11: #{tpu_custom_call.1} parent=5 // pred_region
        %s209 = ssub.s32 %s22, 1
        // Predicated region
        $region13: #{tpu_custom_call.1} parent=11 // pred_check
          %p210 = pneg %p69
        $region14: #{tpu_custom_call.1} parent=11 // pred_check_branch
          %212 = sbr.rel (%p210) target = $region16
        $region15: #{tpu_custom_call.1} parent=11 // pred_region
          %214 = vsyncadd [#allocation8], 0
          %s215 = sshll.u32 %s1, 4
          %s216 = int_to_ptr.hbm [resolvable:$true] %s215
          %s217 = sshll.u32 [#allocation7], 4
          %s218 = int_to_ptr.vmem [resolvable:$true] %s217
          %223 = dma.hbm_to_vmem [thread:$0]  %s216, 12288, %s218, [#allocation8], 128, 128, 8
        $region16: #{tpu_custom_call.1} parent=11 // pred_fallthru
          _
        // Predicated region
        $region17: #{tpu_custom_call.1} parent=11 // pred_check
          %p224 = pneg %p90
        $region18: #{tpu_custom_call.1} parent=11 // pred_check_branch
          %226 = sbr.rel (%p224) target = $region20
        $region19: #{tpu_custom_call.1} parent=11 // pred_region
          %228 = vsyncadd [#allocation8], 0
          %s230 = sshll.u32 %s2, 4
          %s231 = int_to_ptr.hbm [resolvable:$true] %s230
          %s232 = sshll.u32 [#allocation9], 4
          %s233 = int_to_ptr.vmem [resolvable:$true] %s232
          %235 = dma.hbm_to_vmem [thread:$0]  %s231, 16, %s233, [#allocation8]
        $region20: #{tpu_custom_call.1} parent=11 // pred_fallthru
          _
        // Predicated region
        $region21: #{tpu_custom_call.1} parent=11 // pred_check
          %p236 = pneg %p111
        $region22: #{tpu_custom_call.1} parent=11 // pred_check_branch
          %238 = sbr.rel (%p236) target = $region24
        $region23: #{tpu_custom_call.1} parent=11 // pred_region
          %240 = vsyncadd [#allocation11], 0
          %s241 = sshll.u32 %s3, 4
          %s242 = int_to_ptr.hbm [resolvable:$true] %s241
          %s243 = sshll.u32 [#allocation10], 4
          %s244 = int_to_ptr.vmem [resolvable:$true] %s243
          %249 = dma.hbm_to_vmem [thread:$0]  %s242, 12288, %s244, [#allocation11], 768, 768, 48
        $region24: #{tpu_custom_call.1} parent=11 // pred_fallthru
          _
        // Predicated region
        $region25: #{tpu_custom_call.1} parent=11 // pred_check
          %p250 = pneg %p132
        $region26: #{tpu_custom_call.1} parent=11 // pred_check_branch
          %252 = sbr.rel (%p250) target = $region28
        $region27: #{tpu_custom_call.1} parent=11 // pred_region
          %254 = vsyncadd [#allocation11], 0
          %s256 = sshll.u32 %s4, 4
          %s257 = int_to_ptr.hbm [resolvable:$true] %s256
          %s258 = sshll.u32 [#allocation12], 4
          %s259 = int_to_ptr.vmem [resolvable:$true] %s258
          %261 = dma.hbm_to_vmem [thread:$0]  %s257, 96, %s259, [#allocation11]
        $region28: #{tpu_custom_call.1} parent=11 // pred_fallthru
          _
        // Predicated region
        $region29: #{tpu_custom_call.1} parent=11 // pred_check
          %p262 = pneg %p153
        $region30: #{tpu_custom_call.1} parent=11 // pred_check_branch
          %264 = sbr.rel (%p262) target = $region32
        $region31: #{tpu_custom_call.1} parent=11 // pred_region
          %266 = vsyncadd [#allocation14], 0
          %s268 = sshll.u32 %s5, 4
          %s269 = int_to_ptr.hbm [resolvable:$true] %s268
          %s270 = sshll.u32 [#allocation13], 4
          %s271 = int_to_ptr.vmem [resolvable:$true] %s270
          %273 = dma.hbm_to_vmem [thread:$0]  %s269, 96, %s271, [#allocation14]
        $region32: #{tpu_custom_call.1} parent=11 // pred_fallthru
          _
        // Predicated region
        $region33: #{tpu_custom_call.1} parent=11 // pred_check
          %p274 = pneg %p174
        $region34: #{tpu_custom_call.1} parent=11 // pred_check_branch
          %276 = sbr.rel (%p274) target = $region36
        $region35: #{tpu_custom_call.1} parent=11 // pred_region
          _
        $region36: #{tpu_custom_call.1} parent=11 // pred_fallthru
          _
      $region12: #{tpu_custom_call.1} parent=5 // pred_fallthru
        _
      %p277 = scmp.lt.s32.totalorder %s22, 4
      // Predicated region
      $region37: #{tpu_custom_call.1} parent=5 // pred_check
        %p278 = pneg %p277
      $region38: #{tpu_custom_call.1} parent=5 // pred_check_branch
        %280 = sbr.rel (%p278) target = $region40
      $region39: #{tpu_custom_call.1} parent=5 // pred_region
        // Predicated region
        $region41: #{tpu_custom_call.1} parent=39 // pred_check
          %p281 = pneg %p42
        $region42: #{tpu_custom_call.1} parent=39 // pred_check_branch
          %283 = sbr.rel (%p281) target = $region44
        $region43: #{tpu_custom_call.1} parent=39 // pred_region
          %s284 = sand.u32 %s32, 1
          %s285 = scalar_lea.sflag [#allocation5], %s284
          %s286 = sand.u32 %s32, 1
          %s287 = smul.addr %s286, 960
          %s288 = scalar_lea.vmem [#allocation4], %s287
          %s289 = smul.u32 20, %s22
          %291 = vsyncadd %s285, 0
          %s292 = smul.addr %s289, 6
          %s293 = smul.addr %s292, 8
          %s294 = scalar_lea.hbm %s0, %s293
          %s295 = sshll.u32 %s294, 4
          %s296 = int_to_ptr.hbm [resolvable:$true] %s295
          %s297 = sshll.u32 %s288, 4
          %s298 = int_to_ptr.vmem [resolvable:$true] %s297
          %303 = dma.hbm_to_vmem [thread:$0]  %s296, 15360, %s298, %s285, 768, 768, 48
        $region44: #{tpu_custom_call.1} parent=39 // pred_fallthru
          _
      $region40: #{tpu_custom_call.1} parent=5 // pred_fallthru
        _
      %p304 = scmp.le.s32.totalorder 1, %s22
      %p305 = scmp.lt.s32.totalorder %s22, 5
      %p306 = pnand %p304, %p305
      %p307 = pneg %p306
      // Predicated region
      $region45: #{tpu_custom_call.1} parent=5 // pred_check
        _
      $region46: #{tpu_custom_call.1} parent=5 // pred_check_branch
        %309 = sbr.rel (%p306) target = $region48
      $region47: #{tpu_custom_call.1} parent=5 // pred_region
        %s310 = ssub.s32 %s22, 1
        %s311 = sand.u32 %s35, 1
        %s312 = scalar_lea.sflag [#allocation5], %s311
        %s313 = sand.u32 %s35, 1
        %s314 = smul.addr %s313, 960
        %s315 = scalar_lea.vmem [#allocation4], %s314
        // Predicated region
        $region49: #{tpu_custom_call.1} parent=47 // pred_check
          %p316 = pneg %p48
        $region50: #{tpu_custom_call.1} parent=47 // pred_check_branch
          %318 = sbr.rel (%p316) target = $region52
        $region51: #{tpu_custom_call.1} parent=47 // pred_region
          %320 = dma.done %s312, 15360
        $region52: #{tpu_custom_call.1} parent=47 // pred_fallthru
          _
        // Predicated region
        $region53: #{tpu_custom_call.1} parent=47 // pred_check
          %p321 = pneg %p69
        $region54: #{tpu_custom_call.1} parent=47 // pred_check_branch
          %323 = sbr.rel (%p321) target = $region56
        $region55: #{tpu_custom_call.1} parent=47 // pred_region
          %325 = dma.done [#allocation8], 12288
        $region56: #{tpu_custom_call.1} parent=47 // pred_fallthru
          _
        // Predicated region
        $region57: #{tpu_custom_call.1} parent=47 // pred_check
          %p326 = pneg %p90
        $region58: #{tpu_custom_call.1} parent=47 // pred_check_branch
          %328 = sbr.rel (%p326) target = $region60
        $region59: #{tpu_custom_call.1} parent=47 // pred_region
          %330 = dma.done [#allocation8], 16
        $region60: #{tpu_custom_call.1} parent=47 // pred_fallthru
          _
        // Predicated region
        $region61: #{tpu_custom_call.1} parent=47 // pred_check
          %p331 = pneg %p111
        $region62: #{tpu_custom_call.1} parent=47 // pred_check_branch
          %333 = sbr.rel (%p331) target = $region64
        $region63: #{tpu_custom_call.1} parent=47 // pred_region
          %335 = dma.done [#allocation11], 12288
        $region64: #{tpu_custom_call.1} parent=47 // pred_fallthru
          _
        // Predicated region
        $region65: #{tpu_custom_call.1} parent=47 // pred_check
          %p336 = pneg %p132
        $region66: #{tpu_custom_call.1} parent=47 // pred_check_branch
          %338 = sbr.rel (%p336) target = $region68
        $region67: #{tpu_custom_call.1} parent=47 // pred_region
          %340 = dma.done [#allocation11], 96
        $region68: #{tpu_custom_call.1} parent=47 // pred_fallthru
          _
        // Predicated region
        $region69: #{tpu_custom_call.1} parent=47 // pred_check
          %p341 = pneg %p153
        $region70: #{tpu_custom_call.1} parent=47 // pred_check_branch
          %343 = sbr.rel (%p341) target = $region72
        $region71: #{tpu_custom_call.1} parent=47 // pred_region
          %345 = dma.done [#allocation14], 96
        $region72: #{tpu_custom_call.1} parent=47 // pred_fallthru
          _
        %s346 = sand.u32 %s35, 1
        %s347 = scalar_lea.sflag [#allocation5], %s346
        %s348 = sand.u32 %s35, 1
        %s349 = smul.addr %s348, 960
        %s350 = scalar_lea.vmem [#allocation4], %s349
        %p351 = pneg %p48
        %p352 = pneg %p45
        %p353 = pneg %p69
        %p354 = pneg %p66
        %p355 = pneg %p90
        %p356 = pneg %p87
        %p357 = pneg %p111
        %p358 = pneg %p108
        %p359 = pneg %p132
        %p360 = pneg %p129
        %p361 = pneg %p153
        %p362 = pneg %p150
        %p363 = pneg %p174
        %p364 = pneg %p171
        %p365 = pneg %p195
        %p366 = pneg %p192
        %s367 = smul.u32 20, %s27
        %p368 = scmp.eq.s32.totalorder %s27, 0
        // Predicated region
        $region73: #{tpu_custom_call.1} parent=47 // pred_check
          %p369 = pneg %p368
        $region74: #{tpu_custom_call.1} parent=47 // pred_check_branch
          %371 = sbr.rel (%p369) target = $region76
        $region75: #{tpu_custom_call.1} parent=47 // pred_region
          %v372 = vlaneseq
          %vm373 = vcmp.ge.s32.totalorder %v372, 0
          %vm374 = vcmp.lt.s32.totalorder %v372, 768
          %vm375 = vmand %vm373, %vm374
          %376 = vst.msk [vmem:[#allocation2] sm:$0x3f] %vm375, 0.0
        $region76: #{tpu_custom_call.1} parent=47 // pred_fallthru
          _
        %v377 = vld [vmem:[%s315] sm:$0xff]
        %v378 = vld [vmem:[%s315 + $0x8] sm:$0xff]
        %v379 = vld [vmem:[%s315 + $0x10] sm:$0xff]
        %v380 = vld [vmem:[%s315 + $0x18] sm:$0xff]
        %v381 = vld [vmem:[%s315 + $0x20] sm:$0xff]
        %v382 = vld [vmem:[%s315 + $0x28] sm:$0xff]
        %v383 = vld [vmem:[%s315 + $0x30] sm:$0xff]
        %v384 = vld [vmem:[%s315 + $0x38] sm:$0xff]
        %v385 = vld [vmem:[%s315 + $0x40] sm:$0xff]
        %v386 = vld [vmem:[%s315 + $0x48] sm:$0xff]
        %v387 = vld [vmem:[%s315 + $0x50] sm:$0xff]
        %v388 = vld [vmem:[%s315 + $0x58] sm:$0xff]
        %v389 = vld [vmem:[%s315 + $0x60] sm:$0xff]
        %v390 = vld [vmem:[%s315 + $0x68] sm:$0xff]
        %v391 = vld [vmem:[%s315 + $0x70] sm:$0xff]
        %v392 = vld [vmem:[%s315 + $0x78] sm:$0xff]
        %v393 = vld [vmem:[%s315 + $0x80] sm:$0xff]
        %v394 = vld [vmem:[%s315 + $0x88] sm:$0xff]
        %v395 = vld [vmem:[%s315 + $0x90] sm:$0xff]
        %v396 = vld [vmem:[%s315 + $0x98] sm:$0xff]
        %v397 = vld [vmem:[%s315 + $0xa0] sm:$0xff]
        %v398 = vld [vmem:[%s315 + $0xa8] sm:$0xff]
        %v399 = vld [vmem:[%s315 + $0xb0] sm:$0xff]
        %v400 = vld [vmem:[%s315 + $0xb8] sm:$0xff]
        %v401 = vld [vmem:[%s315 + $0xc0] sm:$0xff]
        %v402 = vld [vmem:[%s315 + $0xc8] sm:$0xff]
        %v403 = vld [vmem:[%s315 + $0xd0] sm:$0xff]
        %v404 = vld [vmem:[%s315 + $0xd8] sm:$0xff]
        %v405 = vld [vmem:[%s315 + $0xe0] sm:$0xff]
        %v406 = vld [vmem:[%s315 + $0xe8] sm:$0xff]
        %v407 = vld [vmem:[%s315 + $0xf0] sm:$0xff]
        %v408 = vld [vmem:[%s315 + $0xf8] sm:$0xff]
        %v409 = vld [vmem:[%s315 + $0x100] sm:$0xff]
        %v410 = vld [vmem:[%s315 + $0x108] sm:$0xff]
        %v411 = vld [vmem:[%s315 + $0x110] sm:$0xff]
        %v412 = vld [vmem:[%s315 + $0x118] sm:$0xff]
        %v413 = vld [vmem:[%s315 + $0x120] sm:$0xff]
        %v414 = vld [vmem:[%s315 + $0x128] sm:$0xff]
        %v415 = vld [vmem:[%s315 + $0x130] sm:$0xff]
        %v416 = vld [vmem:[%s315 + $0x138] sm:$0xff]
        %v417 = vld [vmem:[%s315 + $0x140] sm:$0xff]
        %v418 = vld [vmem:[%s315 + $0x148] sm:$0xff]
        %v419 = vld [vmem:[%s315 + $0x150] sm:$0xff]
        %v420 = vld [vmem:[%s315 + $0x158] sm:$0xff]
        %v421 = vld [vmem:[%s315 + $0x160] sm:$0xff]
        %v422 = vld [vmem:[%s315 + $0x168] sm:$0xff]
        %v423 = vld [vmem:[%s315 + $0x170] sm:$0xff]
        %v424 = vld [vmem:[%s315 + $0x178] sm:$0xff]
        %v425 = vld [vmem:[%s315 + $0x180] sm:$0xff]
        %v426 = vld [vmem:[%s315 + $0x188] sm:$0xff]
        %v427 = vld [vmem:[%s315 + $0x190] sm:$0xff]
        %v428 = vld [vmem:[%s315 + $0x198] sm:$0xff]
        %v429 = vld [vmem:[%s315 + $0x1a0] sm:$0xff]
        %v430 = vld [vmem:[%s315 + $0x1a8] sm:$0xff]
        %v431 = vld [vmem:[%s315 + $0x1b0] sm:$0xff]
        %v432 = vld [vmem:[%s315 + $0x1b8] sm:$0xff]
        %v433 = vld [vmem:[%s315 + $0x1c0] sm:$0xff]
        %v434 = vld [vmem:[%s315 + $0x1c8] sm:$0xff]
        %v435 = vld [vmem:[%s315 + $0x1d0] sm:$0xff]
        %v436 = vld [vmem:[%s315 + $0x1d8] sm:$0xff]
        %v437 = vmax.f32 %v377, 1e-06
        %v438 = vmax.f32 %v378, 1e-06
        %v439 = vmax.f32 %v379, 1e-06
        %v440 = vmax.f32 %v380, 1e-06
        %v441 = vmax.f32 %v381, 1e-06
        %v442 = vmax.f32 %v382, 1e-06
        %v443 = vmax.f32 %v383, 1e-06
        %v444 = vmax.f32 %v384, 1e-06
        %v445 = vmax.f32 %v385, 1e-06
        %v446 = vmax.f32 %v386, 1e-06
        %v447 = vmax.f32 %v387, 1e-06
        %v448 = vmax.f32 %v388, 1e-06
        %v449 = vmax.f32 %v389, 1e-06
        %v450 = vmax.f32 %v390, 1e-06
        %v451 = vmax.f32 %v391, 1e-06
        %v452 = vmax.f32 %v392, 1e-06
        %v453 = vmax.f32 %v393, 1e-06
        %v454 = vmax.f32 %v394, 1e-06
        %v455 = vmax.f32 %v395, 1e-06
        %v456 = vmax.f32 %v396, 1e-06
        %v457 = vmax.f32 %v397, 1e-06
        %v458 = vmax.f32 %v398, 1e-06
        %v459 = vmax.f32 %v399, 1e-06
        %v460 = vmax.f32 %v400, 1e-06
        %v461 = vmax.f32 %v401, 1e-06
        %v462 = vmax.f32 %v402, 1e-06
        %v463 = vmax.f32 %v403, 1e-06
        %v464 = vmax.f32 %v404, 1e-06
        %v465 = vmax.f32 %v405, 1e-06
        %v466 = vmax.f32 %v406, 1e-06
        %v467 = vmax.f32 %v407, 1e-06
        %v468 = vmax.f32 %v408, 1e-06
        %v469 = vmax.f32 %v409, 1e-06
        %v470 = vmax.f32 %v410, 1e-06
        %v471 = vmax.f32 %v411, 1e-06
        %v472 = vmax.f32 %v412, 1e-06
        %v473 = vmax.f32 %v413, 1e-06
        %v474 = vmax.f32 %v414, 1e-06
        %v475 = vmax.f32 %v415, 1e-06
        %v476 = vmax.f32 %v416, 1e-06
        %v477 = vmax.f32 %v417, 1e-06
        %v478 = vmax.f32 %v418, 1e-06
        %v479 = vmax.f32 %v419, 1e-06
        %v480 = vmax.f32 %v420, 1e-06
        %v481 = vmax.f32 %v421, 1e-06
        %v482 = vmax.f32 %v422, 1e-06
        %v483 = vmax.f32 %v423, 1e-06
        %v484 = vmax.f32 %v424, 1e-06
        %v485 = vmax.f32 %v425, 1e-06
        %v486 = vmax.f32 %v426, 1e-06
        %v487 = vmax.f32 %v427, 1e-06
        %v488 = vmax.f32 %v428, 1e-06
        %v489 = vmax.f32 %v429, 1e-06
        %v490 = vmax.f32 %v430, 1e-06
        %v491 = vmax.f32 %v431, 1e-06
        %v492 = vmax.f32 %v432, 1e-06
        %v493 = vmax.f32 %v433, 1e-06
        %v494 = vmax.f32 %v434, 1e-06
        %v495 = vmax.f32 %v435, 1e-06
        %v496 = vmax.f32 %v436, 1e-06
        %v497 = vmul.f32 %v437, %v437
        %v498 = vmul.f32 %v438, %v438
        %v499 = vmul.f32 %v439, %v439
        %v500 = vmul.f32 %v440, %v440
        %v501 = vmul.f32 %v441, %v441
        %v502 = vmul.f32 %v442, %v442
        %v503 = vmul.f32 %v443, %v443
        %v504 = vmul.f32 %v444, %v444
        %v505 = vmul.f32 %v445, %v445
        %v506 = vmul.f32 %v446, %v446
        %v507 = vmul.f32 %v447, %v447
        %v508 = vmul.f32 %v448, %v448
        %v509 = vmul.f32 %v449, %v449
        %v510 = vmul.f32 %v450, %v450
        %v511 = vmul.f32 %v451, %v451
        %v512 = vmul.f32 %v452, %v452
        %v513 = vmul.f32 %v453, %v453
        %v514 = vmul.f32 %v454, %v454
        %v515 = vmul.f32 %v455, %v455
        %v516 = vmul.f32 %v456, %v456
        %v517 = vmul.f32 %v457, %v457
        %v518 = vmul.f32 %v458, %v458
        %v519 = vmul.f32 %v459, %v459
        %v520 = vmul.f32 %v460, %v460
        %v521 = vmul.f32 %v461, %v461
        %v522 = vmul.f32 %v462, %v462
        %v523 = vmul.f32 %v463, %v463
        %v524 = vmul.f32 %v464, %v464
        %v525 = vmul.f32 %v465, %v465
        %v526 = vmul.f32 %v466, %v466
        %v527 = vmul.f32 %v467, %v467
        %v528 = vmul.f32 %v468, %v468
        %v529 = vmul.f32 %v469, %v469
        %v530 = vmul.f32 %v470, %v470
        %v531 = vmul.f32 %v471, %v471
        %v532 = vmul.f32 %v472, %v472
        %v533 = vmul.f32 %v473, %v473
        %v534 = vmul.f32 %v474, %v474
        %v535 = vmul.f32 %v475, %v475
        %v536 = vmul.f32 %v476, %v476
        %v537 = vmul.f32 %v477, %v477
        %v538 = vmul.f32 %v478, %v478
        %v539 = vmul.f32 %v479, %v479
        %v540 = vmul.f32 %v480, %v480
        %v541 = vmul.f32 %v481, %v481
        %v542 = vmul.f32 %v482, %v482
        %v543 = vmul.f32 %v483, %v483
        %v544 = vmul.f32 %v484, %v484
        %v545 = vmul.f32 %v485, %v485
        %v546 = vmul.f32 %v486, %v486
        %v547 = vmul.f32 %v487, %v487
        %v548 = vmul.f32 %v488, %v488
        %v549 = vmul.f32 %v489, %v489
        %v550 = vmul.f32 %v490, %v490
        %v551 = vmul.f32 %v491, %v491
        %v552 = vmul.f32 %v492, %v492
        %v553 = vmul.f32 %v493, %v493
        %v554 = vmul.f32 %v494, %v494
        %v555 = vmul.f32 %v495, %v495
        %v556 = vmul.f32 %v496, %v496
        %v557 = vmul.f32 %v497, %v437
        %v558 = vmul.f32 %v498, %v438
        %v559 = vmul.f32 %v499, %v439
        %v560 = vmul.f32 %v500, %v440
        %v561 = vmul.f32 %v501, %v441
        %v562 = vmul.f32 %v502, %v442
        %v563 = vmul.f32 %v503, %v443
        %v564 = vmul.f32 %v504, %v444
        %v565 = vmul.f32 %v505, %v445
        %v566 = vmul.f32 %v506, %v446
        %v567 = vmul.f32 %v507, %v447
        %v568 = vmul.f32 %v508, %v448
        %v569 = vmul.f32 %v509, %v449
        %v570 = vmul.f32 %v510, %v450
        %v571 = vmul.f32 %v511, %v451
        %v572 = vmul.f32 %v512, %v452
        %v573 = vmul.f32 %v513, %v453
        %v574 = vmul.f32 %v514, %v454
        %v575 = vmul.f32 %v515, %v455
        %v576 = vmul.f32 %v516, %v456
        %v577 = vmul.f32 %v517, %v457
        %v578 = vmul.f32 %v518, %v458
        %v579 = vmul.f32 %v519, %v459
        %v580 = vmul.f32 %v520, %v460
        %v581 = vmul.f32 %v521, %v461
        %v582 = vmul.f32 %v522, %v462
        %v583 = vmul.f32 %v523, %v463
        %v584 = vmul.f32 %v524, %v464
        %v585 = vmul.f32 %v525, %v465
        %v586 = vmul.f32 %v526, %v466
        %v587 = vmul.f32 %v527, %v467
        %v588 = vmul.f32 %v528, %v468
        %v589 = vmul.f32 %v529, %v469
        %v590 = vmul.f32 %v530, %v470
        %v591 = vmul.f32 %v531, %v471
        %v592 = vmul.f32 %v532, %v472
        %v593 = vmul.f32 %v533, %v473
        %v594 = vmul.f32 %v534, %v474
        %v595 = vmul.f32 %v535, %v475
        %v596 = vmul.f32 %v536, %v476
        %v597 = vmul.f32 %v537, %v477
        %v598 = vmul.f32 %v538, %v478
        %v599 = vmul.f32 %v539, %v479
        %v600 = vmul.f32 %v540, %v480
        %v601 = vmul.f32 %v541, %v481
        %v602 = vmul.f32 %v542, %v482
        %v603 = vmul.f32 %v543, %v483
        %v604 = vmul.f32 %v544, %v484
        %v605 = vmul.f32 %v545, %v485
        %v606 = vmul.f32 %v546, %v486
        %v607 = vmul.f32 %v547, %v487
        %v608 = vmul.f32 %v548, %v488
        %v609 = vmul.f32 %v549, %v489
        %v610 = vmul.f32 %v550, %v490
        %v611 = vmul.f32 %v551, %v491
        %v612 = vmul.f32 %v552, %v492
        %v613 = vmul.f32 %v553, %v493
        %v614 = vmul.f32 %v554, %v494
        %v615 = vmul.f32 %v555, %v495
        %v616 = vmul.f32 %v556, %v496
        %v617 = vld [vmem:[#allocation2] sm:$0x3f]
        %v618 = vadd.f32 %v557, %v563
        %v619 = vadd.f32 %v618, %v569
        %v620 = vadd.f32 %v619, %v575
        %v621 = vadd.f32 %v620, %v581
        %v622 = vadd.f32 %v621, %v587
        %v623 = vadd.f32 %v622, %v593
        %v624 = vadd.f32 %v623, %v599
        %v625 = vadd.f32 %v624, %v605
        %v626 = vadd.f32 %v625, %v611
        %v627 = vrot.slane %v626, 4
        %v628 = vadd.f32 %v626, %v627
        %v629 = vrot.slane %v628, 2
        %v630 = vadd.f32 %v628, %v629
        %v631 = vrot.slane %v630, 1
        %v632 = vadd.f32 %v630, %v631
        %v633 = vadd.f32 %v558, %v564
        %v634 = vadd.f32 %v633, %v570
        %v635 = vadd.f32 %v634, %v576
        %v636 = vadd.f32 %v635, %v582
        %v637 = vadd.f32 %v636, %v588
        %v638 = vadd.f32 %v637, %v594
        %v639 = vadd.f32 %v638, %v600
        %v640 = vadd.f32 %v639, %v606
        %v641 = vadd.f32 %v640, %v612
        %v642 = vrot.slane %v641, 4
        %v643 = vadd.f32 %v641, %v642
        %v644 = vrot.slane %v643, 2
        %v645 = vadd.f32 %v643, %v644
        %v646 = vrot.slane %v645, 1
        %v647 = vadd.f32 %v645, %v646
        %v648 = vadd.f32 %v559, %v565
        %v649 = vadd.f32 %v648, %v571
        %v650 = vadd.f32 %v649, %v577
        %v651 = vadd.f32 %v650, %v583
        %v652 = vadd.f32 %v651, %v589
        %v653 = vadd.f32 %v652, %v595
        %v654 = vadd.f32 %v653, %v601
        %v655 = vadd.f32 %v654, %v607
        %v656 = vadd.f32 %v655, %v613
        %v657 = vrot.slane %v656, 4
        %v658 = vadd.f32 %v656, %v657
        %v659 = vrot.slane %v658, 2
        %v660 = vadd.f32 %v658, %v659
        %v661 = vrot.slane %v660, 1
        %v662 = vadd.f32 %v660, %v661
        %v663 = vadd.f32 %v560, %v566
        %v664 = vadd.f32 %v663, %v572
        %v665 = vadd.f32 %v664, %v578
        %v666 = vadd.f32 %v665, %v584
        %v667 = vadd.f32 %v666, %v590
        %v668 = vadd.f32 %v667, %v596
        %v669 = vadd.f32 %v668, %v602
        %v670 = vadd.f32 %v669, %v608
        %v671 = vadd.f32 %v670, %v614
        %v672 = vrot.slane %v671, 4
        %v673 = vadd.f32 %v671, %v672
        %v674 = vrot.slane %v673, 2
        %v675 = vadd.f32 %v673, %v674
        %v676 = vrot.slane %v675, 1
        %v677 = vadd.f32 %v675, %v676
        %v678 = vadd.f32 %v561, %v567
        %v679 = vadd.f32 %v678, %v573
        %v680 = vadd.f32 %v679, %v579
        %v681 = vadd.f32 %v680, %v585
        %v682 = vadd.f32 %v681, %v591
        %v683 = vadd.f32 %v682, %v597
        %v684 = vadd.f32 %v683, %v603
        %v685 = vadd.f32 %v684, %v609
        %v686 = vadd.f32 %v685, %v615
        %v687 = vrot.slane %v686, 4
        %v688 = vadd.f32 %v686, %v687
        %v689 = vrot.slane %v688, 2
        %v690 = vadd.f32 %v688, %v689
        %v691 = vrot.slane %v690, 1
        %v692 = vadd.f32 %v690, %v691
        %v693 = vadd.f32 %v562, %v568
        %v694 = vadd.f32 %v693, %v574
        %v695 = vadd.f32 %v694, %v580
        %v696 = vadd.f32 %v695, %v586
        %v697 = vadd.f32 %v696, %v592
        %v698 = vadd.f32 %v697, %v598
        %v699 = vadd.f32 %v698, %v604
        %v700 = vadd.f32 %v699, %v610
        %v701 = vadd.f32 %v700, %v616
        %v702 = vrot.slane %v701, 4
        %v703 = vadd.f32 %v701, %v702
        %v704 = vrot.slane %v703, 2
        %v705 = vadd.f32 %v703, %v704
        %v706 = vrot.slane %v705, 1
        %v707 = vadd.f32 %v705, %v706
        %v714 = vrot.slane %v647, 7
        %v715 = vrot.slane %v662, 6
        %v716 = vrot.slane %v677, 5
        %v717 = vrot.slane %v692, 4
        %v718 = vrot.slane %v707, 3
        %vm719 = vcmask 1040384
        %v720 = vsel %vm719, %v632, %v714
        %vm721 = vcmask 1041408
        %v722 = vsel %vm721, %v720, %v715
        %vm723 = vcmask 1043459
        %v724 = vsel %vm723, %v716, %v717
        %vm725 = vcmask 1044483
        %v726 = vsel %vm725, %v724, %v718
        %vm727 = vcmask 1042432
        %v728 = vsel %vm727, %v722, %v726
        %v730 = vadd.f32 %v617, %v728
        %v731 = vlaneseq
        %vm732 = vcmp.ge.s32.totalorder %v731, 0
        %vm733 = vcmp.lt.s32.totalorder %v731, 768
        %vm734 = vmand %vm732, %vm733
        %735 = vst.msk [vmem:[#allocation2] sm:$0x3f] %vm734, %v730
        %v736 = vld [vmem:[%s315 + $0x1e0] sm:$0xff]
        %v737 = vld [vmem:[%s315 + $0x1e8] sm:$0xff]
        %v738 = vld [vmem:[%s315 + $0x1f0] sm:$0xff]
        %v739 = vld [vmem:[%s315 + $0x1f8] sm:$0xff]
        %v740 = vld [vmem:[%s315 + $0x200] sm:$0xff]
        %v741 = vld [vmem:[%s315 + $0x208] sm:$0xff]
        %v742 = vld [vmem:[%s315 + $0x210] sm:$0xff]
        %v743 = vld [vmem:[%s315 + $0x218] sm:$0xff]
        %v744 = vld [vmem:[%s315 + $0x220] sm:$0xff]
        %v745 = vld [vmem:[%s315 + $0x228] sm:$0xff]
        %v746 = vld [vmem:[%s315 + $0x230] sm:$0xff]
        %v747 = vld [vmem:[%s315 + $0x238] sm:$0xff]
        %v748 = vld [vmem:[%s315 + $0x240] sm:$0xff]
        %v749 = vld [vmem:[%s315 + $0x248] sm:$0xff]
        %v750 = vld [vmem:[%s315 + $0x250] sm:$0xff]
        %v751 = vld [vmem:[%s315 + $0x258] sm:$0xff]
        %v752 = vld [vmem:[%s315 + $0x260] sm:$0xff]
        %v753 = vld [vmem:[%s315 + $0x268] sm:$0xff]
        %v754 = vld [vmem:[%s315 + $0x270] sm:$0xff]
        %v755 = vld [vmem:[%s315 + $0x278] sm:$0xff]
        %v756 = vld [vmem:[%s315 + $0x280] sm:$0xff]
        %v757 = vld [vmem:[%s315 + $0x288] sm:$0xff]
        %v758 = vld [vmem:[%s315 + $0x290] sm:$0xff]
        %v759 = vld [vmem:[%s315 + $0x298] sm:$0xff]
        %v760 = vld [vmem:[%s315 + $0x2a0] sm:$0xff]
        %v761 = vld [vmem:[%s315 + $0x2a8] sm:$0xff]
        %v762 = vld [vmem:[%s315 + $0x2b0] sm:$0xff]
        %v763 = vld [vmem:[%s315 + $0x2b8] sm:$0xff]
        %v764 = vld [vmem:[%s315 + $0x2c0] sm:$0xff]
        %v765 = vld [vmem:[%s315 + $0x2c8] sm:$0xff]
        %v766 = vld [vmem:[%s315 + $0x2d0] sm:$0xff]
        %v767 = vld [vmem:[%s315 + $0x2d8] sm:$0xff]
        %v768 = vld [vmem:[%s315 + $0x2e0] sm:$0xff]
        %v769 = vld [vmem:[%s315 + $0x2e8] sm:$0xff]
        %v770 = vld [vmem:[%s315 + $0x2f0] sm:$0xff]
        %v771 = vld [vmem:[%s315 + $0x2f8] sm:$0xff]
        %v772 = vld [vmem:[%s315 + $0x300] sm:$0xff]
        %v773 = vld [vmem:[%s315 + $0x308] sm:$0xff]
        %v774 = vld [vmem:[%s315 + $0x310] sm:$0xff]
        %v775 = vld [vmem:[%s315 + $0x318] sm:$0xff]
        %v776 = vld [vmem:[%s315 + $0x320] sm:$0xff]
        %v777 = vld [vmem:[%s315 + $0x328] sm:$0xff]
        %v778 = vld [vmem:[%s315 + $0x330] sm:$0xff]
        %v779 = vld [vmem:[%s315 + $0x338] sm:$0xff]
        %v780 = vld [vmem:[%s315 + $0x340] sm:$0xff]
        %v781 = vld [vmem:[%s315 + $0x348] sm:$0xff]
        %v782 = vld [vmem:[%s315 + $0x350] sm:$0xff]
        %v783 = vld [vmem:[%s315 + $0x358] sm:$0xff]
        %v784 = vld [vmem:[%s315 + $0x360] sm:$0xff]
        %v785 = vld [vmem:[%s315 + $0x368] sm:$0xff]
        %v786 = vld [vmem:[%s315 + $0x370] sm:$0xff]
        %v787 = vld [vmem:[%s315 + $0x378] sm:$0xff]
        %v788 = vld [vmem:[%s315 + $0x380] sm:$0xff]
        %v789 = vld [vmem:[%s315 + $0x388] sm:$0xff]
        %v790 = vld [vmem:[%s315 + $0x390] sm:$0xff]
        %v791 = vld [vmem:[%s315 + $0x398] sm:$0xff]
        %v792 = vld [vmem:[%s315 + $0x3a0] sm:$0xff]
        %v793 = vld [vmem:[%s315 + $0x3a8] sm:$0xff]
        %v794 = vld [vmem:[%s315 + $0x3b0] sm:$0xff]
        %v795 = vld [vmem:[%s315 + $0x3b8] sm:$0xff]
        %v796 = vmax.f32 %v736, 1e-06
        %v797 = vmax.f32 %v737, 1e-06
        %v798 = vmax.f32 %v738, 1e-06
        %v799 = vmax.f32 %v739, 1e-06
        %v800 = vmax.f32 %v740, 1e-06
        %v801 = vmax.f32 %v741, 1e-06
        %v802 = vmax.f32 %v742, 1e-06
        %v803 = vmax.f32 %v743, 1e-06
        %v804 = vmax.f32 %v744, 1e-06
        %v805 = vmax.f32 %v745, 1e-06
        %v806 = vmax.f32 %v746, 1e-06
        %v807 = vmax.f32 %v747, 1e-06
        %v808 = vmax.f32 %v748, 1e-06
        %v809 = vmax.f32 %v749, 1e-06
        %v810 = vmax.f32 %v750, 1e-06
        %v811 = vmax.f32 %v751, 1e-06
        %v812 = vmax.f32 %v752, 1e-06
        %v813 = vmax.f32 %v753, 1e-06
        %v814 = vmax.f32 %v754, 1e-06
        %v815 = vmax.f32 %v755, 1e-06
        %v816 = vmax.f32 %v756, 1e-06
        %v817 = vmax.f32 %v757, 1e-06
        %v818 = vmax.f32 %v758, 1e-06
        %v819 = vmax.f32 %v759, 1e-06
        %v820 = vmax.f32 %v760, 1e-06
        %v821 = vmax.f32 %v761, 1e-06
        %v822 = vmax.f32 %v762, 1e-06
        %v823 = vmax.f32 %v763, 1e-06
        %v824 = vmax.f32 %v764, 1e-06
        %v825 = vmax.f32 %v765, 1e-06
        %v826 = vmax.f32 %v766, 1e-06
        %v827 = vmax.f32 %v767, 1e-06
        %v828 = vmax.f32 %v768, 1e-06
        %v829 = vmax.f32 %v769, 1e-06
        %v830 = vmax.f32 %v770, 1e-06
        %v831 = vmax.f32 %v771, 1e-06
        %v832 = vmax.f32 %v772, 1e-06
        %v833 = vmax.f32 %v773, 1e-06
        %v834 = vmax.f32 %v774, 1e-06
        %v835 = vmax.f32 %v775, 1e-06
        %v836 = vmax.f32 %v776, 1e-06
        %v837 = vmax.f32 %v777, 1e-06
        %v838 = vmax.f32 %v778, 1e-06
        %v839 = vmax.f32 %v779, 1e-06
        %v840 = vmax.f32 %v780, 1e-06
        %v841 = vmax.f32 %v781, 1e-06
        %v842 = vmax.f32 %v782, 1e-06
        %v843 = vmax.f32 %v783, 1e-06
        %v844 = vmax.f32 %v784, 1e-06
        %v845 = vmax.f32 %v785, 1e-06
        %v846 = vmax.f32 %v786, 1e-06
        %v847 = vmax.f32 %v787, 1e-06
        %v848 = vmax.f32 %v788, 1e-06
        %v849 = vmax.f32 %v789, 1e-06
        %v850 = vmax.f32 %v790, 1e-06
        %v851 = vmax.f32 %v791, 1e-06
        %v852 = vmax.f32 %v792, 1e-06
        %v853 = vmax.f32 %v793, 1e-06
        %v854 = vmax.f32 %v794, 1e-06
        %v855 = vmax.f32 %v795, 1e-06
        %v856 = vmul.f32 %v796, %v796
        %v857 = vmul.f32 %v797, %v797
        %v858 = vmul.f32 %v798, %v798
        %v859 = vmul.f32 %v799, %v799
        %v860 = vmul.f32 %v800, %v800
        %v861 = vmul.f32 %v801, %v801
        %v862 = vmul.f32 %v802, %v802
        %v863 = vmul.f32 %v803, %v803
        %v864 = vmul.f32 %v804, %v804
        %v865 = vmul.f32 %v805, %v805
        %v866 = vmul.f32 %v806, %v806
        %v867 = vmul.f32 %v807, %v807
        %v868 = vmul.f32 %v808, %v808
        %v869 = vmul.f32 %v809, %v809
        %v870 = vmul.f32 %v810, %v810
        %v871 = vmul.f32 %v811, %v811
        %v872 = vmul.f32 %v812, %v812
        %v873 = vmul.f32 %v813, %v813
        %v874 = vmul.f32 %v814, %v814
        %v875 = vmul.f32 %v815, %v815
        %v876 = vmul.f32 %v816, %v816
        %v877 = vmul.f32 %v817, %v817
        %v878 = vmul.f32 %v818, %v818
        %v879 = vmul.f32 %v819, %v819
        %v880 = vmul.f32 %v820, %v820
        %v881 = vmul.f32 %v821, %v821
        %v882 = vmul.f32 %v822, %v822
        %v883 = vmul.f32 %v823, %v823
        %v884 = vmul.f32 %v824, %v824
        %v885 = vmul.f32 %v825, %v825
        %v886 = vmul.f32 %v826, %v826
        %v887 = vmul.f32 %v827, %v827
        %v888 = vmul.f32 %v828, %v828
        %v889 = vmul.f32 %v829, %v829
        %v890 = vmul.f32 %v830, %v830
        %v891 = vmul.f32 %v831, %v831
        %v892 = vmul.f32 %v832, %v832
        %v893 = vmul.f32 %v833, %v833
        %v894 = vmul.f32 %v834, %v834
        %v895 = vmul.f32 %v835, %v835
        %v896 = vmul.f32 %v836, %v836
        %v897 = vmul.f32 %v837, %v837
        %v898 = vmul.f32 %v838, %v838
        %v899 = vmul.f32 %v839, %v839
        %v900 = vmul.f32 %v840, %v840
        %v901 = vmul.f32 %v841, %v841
        %v902 = vmul.f32 %v842, %v842
        %v903 = vmul.f32 %v843, %v843
        %v904 = vmul.f32 %v844, %v844
        %v905 = vmul.f32 %v845, %v845
        %v906 = vmul.f32 %v846, %v846
        %v907 = vmul.f32 %v847, %v847
        %v908 = vmul.f32 %v848, %v848
        %v909 = vmul.f32 %v849, %v849
        %v910 = vmul.f32 %v850, %v850
        %v911 = vmul.f32 %v851, %v851
        %v912 = vmul.f32 %v852, %v852
        %v913 = vmul.f32 %v853, %v853
        %v914 = vmul.f32 %v854, %v854
        %v915 = vmul.f32 %v855, %v855
        %v916 = vmul.f32 %v856, %v796
        %v917 = vmul.f32 %v857, %v797
        %v918 = vmul.f32 %v858, %v798
        %v919 = vmul.f32 %v859, %v799
        %v920 = vmul.f32 %v860, %v800
        %v921 = vmul.f32 %v861, %v801
        %v922 = vmul.f32 %v862, %v802
        %v923 = vmul.f32 %v863, %v803
        %v924 = vmul.f32 %v864, %v804
        %v925 = vmul.f32 %v865, %v805
        %v926 = vmul.f32 %v866, %v806
        %v927 = vmul.f32 %v867, %v807
        %v928 = vmul.f32 %v868, %v808
        %v929 = vmul.f32 %v869, %v809
        %v930 = vmul.f32 %v870, %v810
        %v931 = vmul.f32 %v871, %v811
        %v932 = vmul.f32 %v872, %v812
        %v933 = vmul.f32 %v873, %v813
        %v934 = vmul.f32 %v874, %v814
        %v935 = vmul.f32 %v875, %v815
        %v936 = vmul.f32 %v876, %v816
        %v937 = vmul.f32 %v877, %v817
        %v938 = vmul.f32 %v878, %v818
        %v939 = vmul.f32 %v879, %v819
        %v940 = vmul.f32 %v880, %v820
        %v941 = vmul.f32 %v881, %v821
        %v942 = vmul.f32 %v882, %v822
        %v943 = vmul.f32 %v883, %v823
        %v944 = vmul.f32 %v884, %v824
        %v945 = vmul.f32 %v885, %v825
        %v946 = vmul.f32 %v886, %v826
        %v947 = vmul.f32 %v887, %v827
        %v948 = vmul.f32 %v888, %v828
        %v949 = vmul.f32 %v889, %v829
        %v950 = vmul.f32 %v890, %v830
        %v951 = vmul.f32 %v891, %v831
        %v952 = vmul.f32 %v892, %v832
        %v953 = vmul.f32 %v893, %v833
        %v954 = vmul.f32 %v894, %v834
        %v955 = vmul.f32 %v895, %v835
        %v956 = vmul.f32 %v896, %v836
        %v957 = vmul.f32 %v897, %v837
        %v958 = vmul.f32 %v898, %v838
        %v959 = vmul.f32 %v899, %v839
        %v960 = vmul.f32 %v900, %v840
        %v961 = vmul.f32 %v901, %v841
        %v962 = vmul.f32 %v902, %v842
        %v963 = vmul.f32 %v903, %v843
        %v964 = vmul.f32 %v904, %v844
        %v965 = vmul.f32 %v905, %v845
        %v966 = vmul.f32 %v906, %v846
        %v967 = vmul.f32 %v907, %v847
        %v968 = vmul.f32 %v908, %v848
        %v969 = vmul.f32 %v909, %v849
        %v970 = vmul.f32 %v910, %v850
        %v971 = vmul.f32 %v911, %v851
        %v972 = vmul.f32 %v912, %v852
        %v973 = vmul.f32 %v913, %v853
        %v974 = vmul.f32 %v914, %v854
        %v975 = vmul.f32 %v915, %v855
        %v976 = vld [vmem:[#allocation2] sm:$0x3f]
        %v977 = vadd.f32 %v916, %v922
        %v978 = vadd.f32 %v977, %v928
        %v979 = vadd.f32 %v978, %v934
        %v980 = vadd.f32 %v979, %v940
        %v981 = vadd.f32 %v980, %v946
        %v982 = vadd.f32 %v981, %v952
        %v983 = vadd.f32 %v982, %v958
        %v984 = vadd.f32 %v983, %v964
        %v985 = vadd.f32 %v984, %v970
        %v986 = vrot.slane %v985, 4
        %v987 = vadd.f32 %v985, %v986
        %v988 = vrot.slane %v987, 2
        %v989 = vadd.f32 %v987, %v988
        %v990 = vrot.slane %v989, 1
        %v991 = vadd.f32 %v989, %v990
        %v992 = vadd.f32 %v917, %v923
        %v993 = vadd.f32 %v992, %v929
        %v994 = vadd.f32 %v993, %v935
        %v995 = vadd.f32 %v994, %v941
        %v996 = vadd.f32 %v995, %v947
        %v997 = vadd.f32 %v996, %v953
        %v998 = vadd.f32 %v997, %v959
        %v999 = vadd.f32 %v998, %v965
        %v1000 = vadd.f32 %v999, %v971
        %v1001 = vrot.slane %v1000, 4
        %v1002 = vadd.f32 %v1000, %v1001
        %v1003 = vrot.slane %v1002, 2
        %v1004 = vadd.f32 %v1002, %v1003
        %v1005 = vrot.slane %v1004, 1
        %v1006 = vadd.f32 %v1004, %v1005
        %v1007 = vadd.f32 %v918, %v924
        %v1008 = vadd.f32 %v1007, %v930
        %v1009 = vadd.f32 %v1008, %v936
        %v1010 = vadd.f32 %v1009, %v942
        %v1011 = vadd.f32 %v1010, %v948
        %v1012 = vadd.f32 %v1011, %v954
        %v1013 = vadd.f32 %v1012, %v960
        %v1014 = vadd.f32 %v1013, %v966
        %v1015 = vadd.f32 %v1014, %v972
        %v1016 = vrot.slane %v1015, 4
        %v1017 = vadd.f32 %v1015, %v1016
        %v1018 = vrot.slane %v1017, 2
        %v1019 = vadd.f32 %v1017, %v1018
        %v1020 = vrot.slane %v1019, 1
        %v1021 = vadd.f32 %v1019, %v1020
        %v1022 = vadd.f32 %v919, %v925
        %v1023 = vadd.f32 %v1022, %v931
        %v1024 = vadd.f32 %v1023, %v937
        %v1025 = vadd.f32 %v1024, %v943
        %v1026 = vadd.f32 %v1025, %v949
        %v1027 = vadd.f32 %v1026, %v955
        %v1028 = vadd.f32 %v1027, %v961
        %v1029 = vadd.f32 %v1028, %v967
        %v1030 = vadd.f32 %v1029, %v973
        %v1031 = vrot.slane %v1030, 4
        %v1032 = vadd.f32 %v1030, %v1031
        %v1033 = vrot.slane %v1032, 2
        %v1034 = vadd.f32 %v1032, %v1033
        %v1035 = vrot.slane %v1034, 1
        %v1036 = vadd.f32 %v1034, %v1035
        %v1037 = vadd.f32 %v920, %v926
        %v1038 = vadd.f32 %v1037, %v932
        %v1039 = vadd.f32 %v1038, %v938
        %v1040 = vadd.f32 %v1039, %v944
        %v1041 = vadd.f32 %v1040, %v950
        %v1042 = vadd.f32 %v1041, %v956
        %v1043 = vadd.f32 %v1042, %v962
        %v1044 = vadd.f32 %v1043, %v968
        %v1045 = vadd.f32 %v1044, %v974
        %v1046 = vrot.slane %v1045, 4
        %v1047 = vadd.f32 %v1045, %v1046
        %v1048 = vrot.slane %v1047, 2
        %v1049 = vadd.f32 %v1047, %v1048
        %v1050 = vrot.slane %v1049, 1
        %v1051 = vadd.f32 %v1049, %v1050
        %v1052 = vadd.f32 %v921, %v927
        %v1053 = vadd.f32 %v1052, %v933
        %v1054 = vadd.f32 %v1053, %v939
        %v1055 = vadd.f32 %v1054, %v945
        %v1056 = vadd.f32 %v1055, %v951
        %v1057 = vadd.f32 %v1056, %v957
        %v1058 = vadd.f32 %v1057, %v963
        %v1059 = vadd.f32 %v1058, %v969
        %v1060 = vadd.f32 %v1059, %v975
        %v1061 = vrot.slane %v1060, 4
        %v1062 = vadd.f32 %v1060, %v1061
        %v1063 = vrot.slane %v1062, 2
        %v1064 = vadd.f32 %v1062, %v1063
        %v1065 = vrot.slane %v1064, 1
        %v1066 = vadd.f32 %v1064, %v1065
        %v1073 = vrot.slane %v1006, 7
        %v1074 = vrot.slane %v1021, 6
        %v1075 = vrot.slane %v1036, 5
        %v1076 = vrot.slane %v1051, 4
        %v1077 = vrot.slane %v1066, 3
        %v1078 = vsel %vm719, %v991, %v1073
        %v1079 = vsel %vm721, %v1078, %v1074
        %v1080 = vsel %vm723, %v1075, %v1076
        %v1081 = vsel %vm725, %v1080, %v1077
        %v1082 = vsel %vm727, %v1079, %v1081
        %v1084 = vadd.f32 %v976, %v1082
        %1085 = vst.msk [vmem:[#allocation2] sm:$0x3f] %vm734, %v1084
        %p1086 = scmp.eq.s32.totalorder %s27, 3
        // Predicated region
        $region77: #{tpu_custom_call.1} parent=47 // pred_check
          %p1087 = pneg %p1086
        $region78: #{tpu_custom_call.1} parent=47 // pred_check_branch
          %1089 = sbr.rel (%p1087) target = $region80
        $region79: #{tpu_custom_call.1} parent=47 // pred_region
          %v1090 = vld [vmem:[#allocation2] sm:$0x3f]
          %v1091 = vmul.f32 %v1090, 0.0015625
          %v1092 = vlog2.pop %v1091
          %v1093 = vmul.f32 %v1092, 0.6931472
          %v1094 = vmul.f32 %v1093, 0.33333334
          %v1095 = vmul.f32 %v1094, 1.442695
          %v1096 = vpow.pop %v1095
          %v1097 = vld [vmem:[#allocation7] sm:$0xff]
          %v1098 = vld [vmem:[#allocation7 + $0x8] sm:$0xff]
          %v1099 = vld [vmem:[#allocation7 + $0x10] sm:$0xff]
          %v1100 = vld [vmem:[#allocation7 + $0x18] sm:$0xff]
          %v1101 = vld [vmem:[#allocation7 + $0x20] sm:$0xff]
          %v1102 = vld [vmem:[#allocation7 + $0x28] sm:$0xff]
          %v1103 = vld [vmem:[#allocation7 + $0x30] sm:$0xff]
          %v1104 = vld [vmem:[#allocation7 + $0x38] sm:$0xff]
          %v1105 = vld [vmem:[#allocation7 + $0x40] sm:$0xff]
          %v1106 = vld [vmem:[#allocation7 + $0x48] sm:$0xff]
          %v1107 = vld [vmem:[#allocation7 + $0x50] sm:$0xff]
          %v1108 = vld [vmem:[#allocation7 + $0x58] sm:$0xff]
          %v1109 = vld [vmem:[#allocation7 + $0x60] sm:$0xff]
          %v1110 = vld [vmem:[#allocation7 + $0x68] sm:$0xff]
          %v1111 = vld [vmem:[#allocation7 + $0x70] sm:$0xff]
          %v1112 = vld [vmem:[#allocation7 + $0x78] sm:$0xff]
          %v1113 = vld [vmem:[#allocation7 + $0x80] sm:$0xff]
          %v1114 = vld [vmem:[#allocation7 + $0x88] sm:$0xff]
          %v1115 = vld [vmem:[#allocation7 + $0x90] sm:$0xff]
          %v1116 = vld [vmem:[#allocation7 + $0x98] sm:$0xff]
          %v1117 = vld [vmem:[#allocation7 + $0xa0] sm:$0xff]
          %v1118 = vld [vmem:[#allocation7 + $0xa8] sm:$0xff]
          %v1119 = vld [vmem:[#allocation7 + $0xb0] sm:$0xff]
          %v1120 = vld [vmem:[#allocation7 + $0xb8] sm:$0xff]
          %v1121 = vld [vmem:[#allocation7 + $0xc0] sm:$0xff]
          %v1122 = vld [vmem:[#allocation7 + $0xc8] sm:$0xff]
          %v1123 = vld [vmem:[#allocation7 + $0xd0] sm:$0xff]
          %v1124 = vld [vmem:[#allocation7 + $0xd8] sm:$0xff]
          %v1125 = vld [vmem:[#allocation7 + $0xe0] sm:$0xff]
          %v1126 = vld [vmem:[#allocation7 + $0xe8] sm:$0xff]
          %v1127 = vld [vmem:[#allocation7 + $0xf0] sm:$0xff]
          %v1128 = vld [vmem:[#allocation7 + $0xf8] sm:$0xff]
          %v1129 = vld [vmem:[#allocation7 + $0x100] sm:$0xff]
          %v1130 = vld [vmem:[#allocation7 + $0x108] sm:$0xff]
          %v1131 = vld [vmem:[#allocation7 + $0x110] sm:$0xff]
          %v1132 = vld [vmem:[#allocation7 + $0x118] sm:$0xff]
          %v1133 = vld [vmem:[#allocation7 + $0x120] sm:$0xff]
          %v1134 = vld [vmem:[#allocation7 + $0x128] sm:$0xff]
          %v1135 = vld [vmem:[#allocation7 + $0x130] sm:$0xff]
          %v1136 = vld [vmem:[#allocation7 + $0x138] sm:$0xff]
          %v1137 = vld [vmem:[#allocation7 + $0x140] sm:$0xff]
          %v1138 = vld [vmem:[#allocation7 + $0x148] sm:$0xff]
          %v1139 = vld [vmem:[#allocation7 + $0x150] sm:$0xff]
          %v1140 = vld [vmem:[#allocation7 + $0x158] sm:$0xff]
          %v1141 = vld [vmem:[#allocation7 + $0x160] sm:$0xff]
          %v1142 = vld [vmem:[#allocation7 + $0x168] sm:$0xff]
          %v1143 = vld [vmem:[#allocation7 + $0x170] sm:$0xff]
          %v1144 = vld [vmem:[#allocation7 + $0x178] sm:$0xff]
          %v1145 = vld [vmem:[#allocation7 + $0x180] sm:$0xff]
          %v1146 = vld [vmem:[#allocation7 + $0x188] sm:$0xff]
          %v1147 = vld [vmem:[#allocation7 + $0x190] sm:$0xff]
          %v1148 = vld [vmem:[#allocation7 + $0x198] sm:$0xff]
          %v1149 = vld [vmem:[#allocation7 + $0x1a0] sm:$0xff]
          %v1150 = vld [vmem:[#allocation7 + $0x1a8] sm:$0xff]
          %v1151 = vld [vmem:[#allocation7 + $0x1b0] sm:$0xff]
          %v1152 = vld [vmem:[#allocation7 + $0x1b8] sm:$0xff]
          %v1153 = vld [vmem:[#allocation7 + $0x1c0] sm:$0xff]
          %v1154 = vld [vmem:[#allocation7 + $0x1c8] sm:$0xff]
          %v1155 = vld [vmem:[#allocation7 + $0x1d0] sm:$0xff]
          %v1156 = vld [vmem:[#allocation7 + $0x1d8] sm:$0xff]
          %v1157 = vld [vmem:[#allocation7 + $0x1e0] sm:$0xff]
          %v1158 = vld [vmem:[#allocation7 + $0x1e8] sm:$0xff]
          %v1159 = vld [vmem:[#allocation7 + $0x1f0] sm:$0xff]
          %v1160 = vld [vmem:[#allocation7 + $0x1f8] sm:$0xff]
          %v1161 = vld [vmem:[#allocation7 + $0x200] sm:$0xff]
          %v1162 = vld [vmem:[#allocation7 + $0x208] sm:$0xff]
          %v1163 = vld [vmem:[#allocation7 + $0x210] sm:$0xff]
          %v1164 = vld [vmem:[#allocation7 + $0x218] sm:$0xff]
          %v1165 = vld [vmem:[#allocation7 + $0x220] sm:$0xff]
          %v1166 = vld [vmem:[#allocation7 + $0x228] sm:$0xff]
          %v1167 = vld [vmem:[#allocation7 + $0x230] sm:$0xff]
          %v1168 = vld [vmem:[#allocation7 + $0x238] sm:$0xff]
          %v1169 = vld [vmem:[#allocation7 + $0x240] sm:$0xff]
          %v1170 = vld [vmem:[#allocation7 + $0x248] sm:$0xff]
          %v1171 = vld [vmem:[#allocation7 + $0x250] sm:$0xff]
          %v1172 = vld [vmem:[#allocation7 + $0x258] sm:$0xff]
          %v1173 = vld [vmem:[#allocation7 + $0x260] sm:$0xff]
          %v1174 = vld [vmem:[#allocation7 + $0x268] sm:$0xff]
          %v1175 = vld [vmem:[#allocation7 + $0x270] sm:$0xff]
          %v1176 = vld [vmem:[#allocation7 + $0x278] sm:$0xff]
          %v1177 = vld [vmem:[#allocation7 + $0x280] sm:$0xff]
          %v1178 = vld [vmem:[#allocation7 + $0x288] sm:$0xff]
          %v1179 = vld [vmem:[#allocation7 + $0x290] sm:$0xff]
          %v1180 = vld [vmem:[#allocation7 + $0x298] sm:$0xff]
          %v1181 = vld [vmem:[#allocation7 + $0x2a0] sm:$0xff]
          %v1182 = vld [vmem:[#allocation7 + $0x2a8] sm:$0xff]
          %v1183 = vld [vmem:[#allocation7 + $0x2b0] sm:$0xff]
          %v1184 = vld [vmem:[#allocation7 + $0x2b8] sm:$0xff]
          %v1185 = vld [vmem:[#allocation7 + $0x2c0] sm:$0xff]
          %v1186 = vld [vmem:[#allocation7 + $0x2c8] sm:$0xff]
          %v1187 = vld [vmem:[#allocation7 + $0x2d0] sm:$0xff]
          %v1188 = vld [vmem:[#allocation7 + $0x2d8] sm:$0xff]
          %v1189 = vld [vmem:[#allocation7 + $0x2e0] sm:$0xff]
          %v1190 = vld [vmem:[#allocation7 + $0x2e8] sm:$0xff]
          %v1191 = vld [vmem:[#allocation7 + $0x2f0] sm:$0xff]
          %v1192 = vld [vmem:[#allocation7 + $0x2f8] sm:$0xff]
          %v1193 = vld [vmem:[#allocation9] sm:$0x1]
          %v1195 = vperm.slane %v1096, 0
          %v1196 = vperm.slane %v1096, 1
          %v1197 = vperm.slane %v1096, 2
          %v1198 = vperm.slane %v1096, 3
          %v1199 = vperm.slane %v1096, 4
          %v1200 = vperm.slane %v1096, 5
          %1207 = vmatpush.msra.mxu0 %v1112
          %1208 = vmatpush.msra.mxu0 %v1111
          %1209 = vmatpush.msra.mxu0 %v1110
          %1210 = vmatpush.msra.mxu0 %v1109
          %1211 = vmatpush.msra.mxu0 %v1108
          %1212 = vmatpush.msra.mxu0 %v1107
          %1213 = vmatpush.msra.mxu0 %v1106
          %1214 = vmatpush.msra.mxu0 %v1105
          %1215 = vmatpush.msra.mxu0 %v1104
          %1216 = vmatpush.msra.mxu0 %v1103
          %1217 = vmatpush.msra.mxu0 %v1102
          %1218 = vmatpush.msra.mxu0 %v1101
          %1219 = vmatpush.msra.mxu0 %v1100
          %1220 = vmatpush.msra.mxu0 %v1099
          %1221 = vmatpush.msra.mxu0 %v1098
          %1222 = vmatpush.msra.mxu0 %v1097
          %1223 = vmatmul.f32.gmra.mxu0 %v1195
          %v1224 = vpop.f32.mrf.mxu0
          %v1225 = vadd.f32 %v1193, %v1224
          %1226 = vdwg.mxu0
          %1227 = vmatpush.msra.mxu0 %v1128
          %1228 = vmatpush.msra.mxu0 %v1127
          %1229 = vmatpush.msra.mxu0 %v1126
          %1230 = vmatpush.msra.mxu0 %v1125
          %1231 = vmatpush.msra.mxu0 %v1124
          %1232 = vmatpush.msra.mxu0 %v1123
          %1233 = vmatpush.msra.mxu0 %v1122
          %1234 = vmatpush.msra.mxu0 %v1121
          %1235 = vmatpush.msra.mxu0 %v1120
          %1236 = vmatpush.msra.mxu0 %v1119
          %1237 = vmatpush.msra.mxu0 %v1118
          %1238 = vmatpush.msra.mxu0 %v1117
          %1239 = vmatpush.msra.mxu0 %v1116
          %1240 = vmatpush.msra.mxu0 %v1115
          %1241 = vmatpush.msra.mxu0 %v1114
          %1242 = vmatpush.msra.mxu0 %v1113
          %1243 = vmatmul.f32.gmra.mxu0 %v1196
          %v1244 = vpop.f32.mrf.mxu0
          %v1245 = vadd.f32 %v1225, %v1244
          %1246 = vdwg.mxu0
          %1247 = vmatpush.msra.mxu0 %v1144
          %1248 = vmatpush.msra.mxu0 %v1143
          %1249 = vmatpush.msra.mxu0 %v1142
          %1250 = vmatpush.msra.mxu0 %v1141
          %1251 = vmatpush.msra.mxu0 %v1140
          %1252 = vmatpush.msra.mxu0 %v1139
          %1253 = vmatpush.msra.mxu0 %v1138
          %1254 = vmatpush.msra.mxu0 %v1137
          %1255 = vmatpush.msra.mxu0 %v1136
          %1256 = vmatpush.msra.mxu0 %v1135
          %1257 = vmatpush.msra.mxu0 %v1134
          %1258 = vmatpush.msra.mxu0 %v1133
          %1259 = vmatpush.msra.mxu0 %v1132
          %1260 = vmatpush.msra.mxu0 %v1131
          %1261 = vmatpush.msra.mxu0 %v1130
          %1262 = vmatpush.msra.mxu0 %v1129
          %1263 = vmatmul.f32.gmra.mxu0 %v1197
          %v1264 = vpop.f32.mrf.mxu0
          %v1265 = vadd.f32 %v1245, %v1264
          %1266 = vdwg.mxu0
          %1267 = vmatpush.msra.mxu0 %v1160
          %1268 = vmatpush.msra.mxu0 %v1159
          %1269 = vmatpush.msra.mxu0 %v1158
          %1270 = vmatpush.msra.mxu0 %v1157
          %1271 = vmatpush.msra.mxu0 %v1156
          %1272 = vmatpush.msra.mxu0 %v1155
          %1273 = vmatpush.msra.mxu0 %v1154
          %1274 = vmatpush.msra.mxu0 %v1153
          %1275 = vmatpush.msra.mxu0 %v1152
          %1276 = vmatpush.msra.mxu0 %v1151
          %1277 = vmatpush.msra.mxu0 %v1150
          %1278 = vmatpush.msra.mxu0 %v1149
          %1279 = vmatpush.msra.mxu0 %v1148
          %1280 = vmatpush.msra.mxu0 %v1147
          %1281 = vmatpush.msra.mxu0 %v1146
          %1282 = vmatpush.msra.mxu0 %v1145
          %1283 = vmatmul.f32.gmra.mxu0 %v1198
          %v1284 = vpop.f32.mrf.mxu0
          %v1285 = vadd.f32 %v1265, %v1284
          %1286 = vdwg.mxu0
          %1287 = vmatpush.msra.mxu0 %v1176
          %1288 = vmatpush.msra.mxu0 %v1175
          %1289 = vmatpush.msra.mxu0 %v1174
          %1290 = vmatpush.msra.mxu0 %v1173
          %1291 = vmatpush.msra.mxu0 %v1172
          %1292 = vmatpush.msra.mxu0 %v1171
          %1293 = vmatpush.msra.mxu0 %v1170
          %1294 = vmatpush.msra.mxu0 %v1169
          %1295 = vmatpush.msra.mxu0 %v1168
          %1296 = vmatpush.msra.mxu0 %v1167
          %1297 = vmatpush.msra.mxu0 %v1166
          %1298 = vmatpush.msra.mxu0 %v1165
          %1299 = vmatpush.msra.mxu0 %v1164
          %1300 = vmatpush.msra.mxu0 %v1163
          %1301 = vmatpush.msra.mxu0 %v1162
          %1302 = vmatpush.msra.mxu0 %v1161
          %1303 = vmatmul.f32.gmra.mxu0 %v1199
          %v1304 = vpop.f32.mrf.mxu0
          %v1305 = vadd.f32 %v1285, %v1304
          %1306 = vdwg.mxu0
          %1307 = vmatpush.msra.mxu0 %v1192
          %1308 = vmatpush.msra.mxu0 %v1191
          %1309 = vmatpush.msra.mxu0 %v1190
          %1310 = vmatpush.msra.mxu0 %v1189
          %1311 = vmatpush.msra.mxu0 %v1188
          %1312 = vmatpush.msra.mxu0 %v1187
          %1313 = vmatpush.msra.mxu0 %v1186
          %1314 = vmatpush.msra.mxu0 %v1185
          %1315 = vmatpush.msra.mxu0 %v1184
          %1316 = vmatpush.msra.mxu0 %v1183
          %1317 = vmatpush.msra.mxu0 %v1182
          %1318 = vmatpush.msra.mxu0 %v1181
          %1319 = vmatpush.msra.mxu0 %v1180
          %1320 = vmatpush.msra.mxu0 %v1179
          %1321 = vmatpush.msra.mxu0 %v1178
          %1322 = vmatpush.msra.mxu0 %v1177
          %1323 = vmatmul.f32.gmra.mxu0 %v1200
          %v1324 = vpop.f32.mrf.mxu0
          %v1325 = vadd.f32 %v1305, %v1324
          %1326 = vdwg.mxu0
          %v1327 = vmax.f32 %v1325, 0.0
          %v1328 = vld [vmem:[#allocation10] sm:$0xff]
          %v1329 = vld [vmem:[#allocation10 + $0x8] sm:$0xff]
          %v1330 = vld [vmem:[#allocation10 + $0x10] sm:$0xff]
          %v1331 = vld [vmem:[#allocation10 + $0x18] sm:$0xff]
          %v1332 = vld [vmem:[#allocation10 + $0x20] sm:$0xff]
          %v1333 = vld [vmem:[#allocation10 + $0x28] sm:$0xff]
          %v1334 = vld [vmem:[#allocation10 + $0x30] sm:$0xff]
          %v1335 = vld [vmem:[#allocation10 + $0x38] sm:$0xff]
          %v1336 = vld [vmem:[#allocation10 + $0x40] sm:$0xff]
          %v1337 = vld [vmem:[#allocation10 + $0x48] sm:$0xff]
          %v1338 = vld [vmem:[#allocation10 + $0x50] sm:$0xff]
          %v1339 = vld [vmem:[#allocation10 + $0x58] sm:$0xff]
          %v1340 = vld [vmem:[#allocation10 + $0x60] sm:$0xff]
          %v1341 = vld [vmem:[#allocation10 + $0x68] sm:$0xff]
          %v1342 = vld [vmem:[#allocation10 + $0x70] sm:$0xff]
          %v1343 = vld [vmem:[#allocation10 + $0x78] sm:$0xff]
          %v1344 = vld [vmem:[#allocation10 + $0x80] sm:$0xff]
          %v1345 = vld [vmem:[#allocation10 + $0x88] sm:$0xff]
          %v1346 = vld [vmem:[#allocation10 + $0x90] sm:$0xff]
          %v1347 = vld [vmem:[#allocation10 + $0x98] sm:$0xff]
          %v1348 = vld [vmem:[#allocation10 + $0xa0] sm:$0xff]
          %v1349 = vld [vmem:[#allocation10 + $0xa8] sm:$0xff]
          %v1350 = vld [vmem:[#allocation10 + $0xb0] sm:$0xff]
          %v1351 = vld [vmem:[#allocation10 + $0xb8] sm:$0xff]
          %v1352 = vld [vmem:[#allocation10 + $0xc0] sm:$0xff]
          %v1353 = vld [vmem:[#allocation10 + $0xc8] sm:$0xff]
          %v1354 = vld [vmem:[#allocation10 + $0xd0] sm:$0xff]
          %v1355 = vld [vmem:[#allocation10 + $0xd8] sm:$0xff]
          %v1356 = vld [vmem:[#allocation10 + $0xe0] sm:$0xff]
          %v1357 = vld [vmem:[#allocation10 + $0xe8] sm:$0xff]
          %v1358 = vld [vmem:[#allocation10 + $0xf0] sm:$0xff]
          %v1359 = vld [vmem:[#allocation10 + $0xf8] sm:$0xff]
          %v1360 = vld [vmem:[#allocation10 + $0x100] sm:$0xff]
          %v1361 = vld [vmem:[#allocation10 + $0x108] sm:$0xff]
          %v1362 = vld [vmem:[#allocation10 + $0x110] sm:$0xff]
          %v1363 = vld [vmem:[#allocation10 + $0x118] sm:$0xff]
          %v1364 = vld [vmem:[#allocation10 + $0x120] sm:$0xff]
          %v1365 = vld [vmem:[#allocation10 + $0x128] sm:$0xff]
          %v1366 = vld [vmem:[#allocation10 + $0x130] sm:$0xff]
          %v1367 = vld [vmem:[#allocation10 + $0x138] sm:$0xff]
          %v1368 = vld [vmem:[#allocation10 + $0x140] sm:$0xff]
          %v1369 = vld [vmem:[#allocation10 + $0x148] sm:$0xff]
          %v1370 = vld [vmem:[#allocation10 + $0x150] sm:$0xff]
          %v1371 = vld [vmem:[#allocation10 + $0x158] sm:$0xff]
          %v1372 = vld [vmem:[#allocation10 + $0x160] sm:$0xff]
          %v1373 = vld [vmem:[#allocation10 + $0x168] sm:$0xff]
          %v1374 = vld [vmem:[#allocation10 + $0x170] sm:$0xff]
          %v1375 = vld [vmem:[#allocation10 + $0x178] sm:$0xff]
          %v1376 = vld [vmem:[#allocation10 + $0x180] sm:$0xff]
          %v1377 = vld [vmem:[#allocation10 + $0x188] sm:$0xff]
          %v1378 = vld [vmem:[#allocation10 + $0x190] sm:$0xff]
          %v1379 = vld [vmem:[#allocation10 + $0x198] sm:$0xff]
          %v1380 = vld [vmem:[#allocation10 + $0x1a0] sm:$0xff]
          %v1381 = vld [vmem:[#allocation10 + $0x1a8] sm:$0xff]
          %v1382 = vld [vmem:[#allocation10 + $0x1b0] sm:$0xff]
          %v1383 = vld [vmem:[#allocation10 + $0x1b8] sm:$0xff]
          %v1384 = vld [vmem:[#allocation10 + $0x1c0] sm:$0xff]
          %v1385 = vld [vmem:[#allocation10 + $0x1c8] sm:$0xff]
          %v1386 = vld [vmem:[#allocation10 + $0x1d0] sm:$0xff]
          %v1387 = vld [vmem:[#allocation10 + $0x1d8] sm:$0xff]
          %v1388 = vld [vmem:[#allocation10 + $0x1e0] sm:$0xff]
          %v1389 = vld [vmem:[#allocation10 + $0x1e8] sm:$0xff]
          %v1390 = vld [vmem:[#allocation10 + $0x1f0] sm:$0xff]
          %v1391 = vld [vmem:[#allocation10 + $0x1f8] sm:$0xff]
          %v1392 = vld [vmem:[#allocation10 + $0x200] sm:$0xff]
          %v1393 = vld [vmem:[#allocation10 + $0x208] sm:$0xff]
          %v1394 = vld [vmem:[#allocation10 + $0x210] sm:$0xff]
          %v1395 = vld [vmem:[#allocation10 + $0x218] sm:$0xff]
          %v1396 = vld [vmem:[#allocation10 + $0x220] sm:$0xff]
          %v1397 = vld [vmem:[#allocation10 + $0x228] sm:$0xff]
          %v1398 = vld [vmem:[#allocation10 + $0x230] sm:$0xff]
          %v1399 = vld [vmem:[#allocation10 + $0x238] sm:$0xff]
          %v1400 = vld [vmem:[#allocation10 + $0x240] sm:$0xff]
          %v1401 = vld [vmem:[#allocation10 + $0x248] sm:$0xff]
          %v1402 = vld [vmem:[#allocation10 + $0x250] sm:$0xff]
          %v1403 = vld [vmem:[#allocation10 + $0x258] sm:$0xff]
          %v1404 = vld [vmem:[#allocation10 + $0x260] sm:$0xff]
          %v1405 = vld [vmem:[#allocation10 + $0x268] sm:$0xff]
          %v1406 = vld [vmem:[#allocation10 + $0x270] sm:$0xff]
          %v1407 = vld [vmem:[#allocation10 + $0x278] sm:$0xff]
          %v1408 = vld [vmem:[#allocation10 + $0x280] sm:$0xff]
          %v1409 = vld [vmem:[#allocation10 + $0x288] sm:$0xff]
          %v1410 = vld [vmem:[#allocation10 + $0x290] sm:$0xff]
          %v1411 = vld [vmem:[#allocation10 + $0x298] sm:$0xff]
          %v1412 = vld [vmem:[#allocation10 + $0x2a0] sm:$0xff]
          %v1413 = vld [vmem:[#allocation10 + $0x2a8] sm:$0xff]
          %v1414 = vld [vmem:[#allocation10 + $0x2b0] sm:$0xff]
          %v1415 = vld [vmem:[#allocation10 + $0x2b8] sm:$0xff]
          %v1416 = vld [vmem:[#allocation10 + $0x2c0] sm:$0xff]
          %v1417 = vld [vmem:[#allocation10 + $0x2c8] sm:$0xff]
          %v1418 = vld [vmem:[#allocation10 + $0x2d0] sm:$0xff]
          %v1419 = vld [vmem:[#allocation10 + $0x2d8] sm:$0xff]
          %v1420 = vld [vmem:[#allocation10 + $0x2e0] sm:$0xff]
          %v1421 = vld [vmem:[#allocation10 + $0x2e8] sm:$0xff]
          %v1422 = vld [vmem:[#allocation10 + $0x2f0] sm:$0xff]
          %v1423 = vld [vmem:[#allocation10 + $0x2f8] sm:$0xff]
          %v1424 = vld [vmem:[#allocation12] sm:$0x3f]
          %v1426 = vperm.slane %v1424, 0
          %v1427 = vperm.slane %v1424, 1
          %v1428 = vperm.slane %v1424, 2
          %v1429 = vperm.slane %v1424, 3
          %v1430 = vperm.slane %v1424, 4
          %v1431 = vperm.slane %v1424, 5
          %1438 = vmatpush.msra.mxu0 %v1418
          %1439 = vmatpush.msra.mxu0 %v1412
          %1440 = vmatpush.msra.mxu0 %v1406
          %1441 = vmatpush.msra.mxu0 %v1400
          %1442 = vmatpush.msra.mxu0 %v1394
          %1443 = vmatpush.msra.mxu0 %v1388
          %1444 = vmatpush.msra.mxu0 %v1382
          %1445 = vmatpush.msra.mxu0 %v1376
          %1446 = vmatpush.msra.mxu0 %v1370
          %1447 = vmatpush.msra.mxu0 %v1364
          %1448 = vmatpush.msra.mxu0 %v1358
          %1449 = vmatpush.msra.mxu0 %v1352
          %1450 = vmatpush.msra.mxu0 %v1346
          %1451 = vmatpush.msra.mxu0 %v1340
          %1452 = vmatpush.msra.mxu0 %v1334
          %1453 = vmatpush.msra.mxu0 %v1328
          %1454 = vmatmul.f32.gmra.mxu0 %v1327
          %v1455 = vpop.f32.mrf.mxu0
          %v1456 = vadd.f32 %v1426, %v1455
          %1457 = vdwg.mxu0
          %1458 = vmatpush.msra.mxu0 %v1419
          %1459 = vmatpush.msra.mxu0 %v1413
          %1460 = vmatpush.msra.mxu0 %v1407
          %1461 = vmatpush.msra.mxu0 %v1401
          %1462 = vmatpush.msra.mxu0 %v1395
          %1463 = vmatpush.msra.mxu0 %v1389
          %1464 = vmatpush.msra.mxu0 %v1383
          %1465 = vmatpush.msra.mxu0 %v1377
          %1466 = vmatpush.msra.mxu0 %v1371
          %1467 = vmatpush.msra.mxu0 %v1365
          %1468 = vmatpush.msra.mxu0 %v1359
          %1469 = vmatpush.msra.mxu0 %v1353
          %1470 = vmatpush.msra.mxu0 %v1347
          %1471 = vmatpush.msra.mxu0 %v1341
          %1472 = vmatpush.msra.mxu0 %v1335
          %1473 = vmatpush.msra.mxu0 %v1329
          %1474 = vmatmul.f32.gmra.mxu0 %v1327
          %v1475 = vpop.f32.mrf.mxu0
          %v1476 = vadd.f32 %v1427, %v1475
          %1477 = vdwg.mxu0
          %1478 = vmatpush.msra.mxu0 %v1420
          %1479 = vmatpush.msra.mxu0 %v1414
          %1480 = vmatpush.msra.mxu0 %v1408
          %1481 = vmatpush.msra.mxu0 %v1402
          %1482 = vmatpush.msra.mxu0 %v1396
          %1483 = vmatpush.msra.mxu0 %v1390
          %1484 = vmatpush.msra.mxu0 %v1384
          %1485 = vmatpush.msra.mxu0 %v1378
          %1486 = vmatpush.msra.mxu0 %v1372
          %1487 = vmatpush.msra.mxu0 %v1366
          %1488 = vmatpush.msra.mxu0 %v1360
          %1489 = vmatpush.msra.mxu0 %v1354
          %1490 = vmatpush.msra.mxu0 %v1348
          %1491 = vmatpush.msra.mxu0 %v1342
          %1492 = vmatpush.msra.mxu0 %v1336
          %1493 = vmatpush.msra.mxu0 %v1330
          %1494 = vmatmul.f32.gmra.mxu0 %v1327
          %v1495 = vpop.f32.mrf.mxu0
          %v1496 = vadd.f32 %v1428, %v1495
          %1497 = vdwg.mxu0
          %1498 = vmatpush.msra.mxu0 %v1421
          %1499 = vmatpush.msra.mxu0 %v1415
          %1500 = vmatpush.msra.mxu0 %v1409
          %1501 = vmatpush.msra.mxu0 %v1403
          %1502 = vmatpush.msra.mxu0 %v1397
          %1503 = vmatpush.msra.mxu0 %v1391
          %1504 = vmatpush.msra.mxu0 %v1385
          %1505 = vmatpush.msra.mxu0 %v1379
          %1506 = vmatpush.msra.mxu0 %v1373
          %1507 = vmatpush.msra.mxu0 %v1367
          %1508 = vmatpush.msra.mxu0 %v1361
          %1509 = vmatpush.msra.mxu0 %v1355
          %1510 = vmatpush.msra.mxu0 %v1349
          %1511 = vmatpush.msra.mxu0 %v1343
          %1512 = vmatpush.msra.mxu0 %v1337
          %1513 = vmatpush.msra.mxu0 %v1331
          %1514 = vmatmul.f32.gmra.mxu0 %v1327
          %v1515 = vpop.f32.mrf.mxu0
          %v1516 = vadd.f32 %v1429, %v1515
          %1517 = vdwg.mxu0
          %1518 = vmatpush.msra.mxu0 %v1422
          %1519 = vmatpush.msra.mxu0 %v1416
          %1520 = vmatpush.msra.mxu0 %v1410
          %1521 = vmatpush.msra.mxu0 %v1404
          %1522 = vmatpush.msra.mxu0 %v1398
          %1523 = vmatpush.msra.mxu0 %v1392
          %1524 = vmatpush.msra.mxu0 %v1386
          %1525 = vmatpush.msra.mxu0 %v1380
          %1526 = vmatpush.msra.mxu0 %v1374
          %1527 = vmatpush.msra.mxu0 %v1368
          %1528 = vmatpush.msra.mxu0 %v1362
          %1529 = vmatpush.msra.mxu0 %v1356
          %1530 = vmatpush.msra.mxu0 %v1350
          %1531 = vmatpush.msra.mxu0 %v1344
          %1532 = vmatpush.msra.mxu0 %v1338
          %1533 = vmatpush.msra.mxu0 %v1332
          %1534 = vmatmul.f32.gmra.mxu0 %v1327
          %v1535 = vpop.f32.mrf.mxu0
          %v1536 = vadd.f32 %v1430, %v1535
          %1537 = vdwg.mxu0
          %1538 = vmatpush.msra.mxu0 %v1423
          %1539 = vmatpush.msra.mxu0 %v1417
          %1540 = vmatpush.msra.mxu0 %v1411
          %1541 = vmatpush.msra.mxu0 %v1405
          %1542 = vmatpush.msra.mxu0 %v1399
          %1543 = vmatpush.msra.mxu0 %v1393
          %1544 = vmatpush.msra.mxu0 %v1387
          %1545 = vmatpush.msra.mxu0 %v1381
          %1546 = vmatpush.msra.mxu0 %v1375
          %1547 = vmatpush.msra.mxu0 %v1369
          %1548 = vmatpush.msra.mxu0 %v1363
          %1549 = vmatpush.msra.mxu0 %v1357
          %1550 = vmatpush.msra.mxu0 %v1351
          %1551 = vmatpush.msra.mxu0 %v1345
          %1552 = vmatpush.msra.mxu0 %v1339
          %1553 = vmatpush.msra.mxu0 %v1333
          %1554 = vmatmul.f32.gmra.mxu0 %v1327
          %v1555 = vpop.f32.mrf.mxu0
          %v1556 = vadd.f32 %v1431, %v1555
          %1557 = vdwg.mxu0
          %v1558 = vxor.u32 %v1456, 2147483648
          %v1559 = vxor.u32 %v1476, 2147483648
          %v1560 = vxor.u32 %v1496, 2147483648
          %v1561 = vxor.u32 %v1516, 2147483648
          %v1562 = vxor.u32 %v1536, 2147483648
          %v1563 = vxor.u32 %v1556, 2147483648
          %v1564 = vmul.f32 %v1558, 1.442695
          %v1565 = vpow.pop %v1564
          %v1566 = vmul.f32 %v1559, 1.442695
          %v1567 = vpow.pop %v1566
          %v1568 = vmul.f32 %v1560, 1.442695
          %v1569 = vpow.pop %v1568
          %v1570 = vmul.f32 %v1561, 1.442695
          %v1571 = vpow.pop %v1570
          %v1572 = vmul.f32 %v1562, 1.442695
          %v1573 = vpow.pop %v1572
          %v1574 = vmul.f32 %v1563, 1.442695
          %v1575 = vpow.pop %v1574
          %v1576 = vadd.f32 %v1565, 1.0
          %v1577 = vadd.f32 %v1567, 1.0
          %v1578 = vadd.f32 %v1569, 1.0
          %v1579 = vadd.f32 %v1571, 1.0
          %v1580 = vadd.f32 %v1573, 1.0
          %v1581 = vadd.f32 %v1575, 1.0
          %v1582 = vrcp.pop %v1576
          %v1583 = vmul.f32 %v1576, %v1582
          %v1584 = vsub.f32 1.0, %v1583
          %v1585 = vmul.f32 %v1582, %v1584
          %v1586 = vadd.f32 %v1582, %v1585
          %vm1587 = vweird.f32 %v1576
          %vm1588 = vweird.f32 %v1582
          %vm1589 = vmor %vm1587, %vm1588
          %v1590 = vsel %vm1589, %v1582, %v1586
          %v1591 = vand.u32 2147483647, %v1576
          %vm1592 = vcmp.eq.f32.partialorder %v1591, 8.507059e+37
          %v1593 = vand.u32 %v1576, 2147483648
          %v1594 = vor.u32 1.1754944e-38, %v1593
          %v1595 = vsel %vm1592, %v1594, %v1590
          %v1596 = vmul.f32 1.0, %v1595
          %v1597 = vrcp.pop %v1577
          %v1598 = vmul.f32 %v1577, %v1597
          %v1599 = vsub.f32 1.0, %v1598
          %v1600 = vmul.f32 %v1597, %v1599
          %v1601 = vadd.f32 %v1597, %v1600
          %vm1602 = vweird.f32 %v1577
          %vm1603 = vweird.f32 %v1597
          %vm1604 = vmor %vm1602, %vm1603
          %v1605 = vsel %vm1604, %v1597, %v1601
          %v1606 = vand.u32 2147483647, %v1577
          %vm1607 = vcmp.eq.f32.partialorder %v1606, 8.507059e+37
          %v1608 = vand.u32 %v1577, 2147483648
          %v1609 = vor.u32 1.1754944e-38, %v1608
          %v1610 = vsel %vm1607, %v1609, %v1605
          %v1611 = vmul.f32 1.0, %v1610
          %v1612 = vrcp.pop %v1578
          %v1613 = vmul.f32 %v1578, %v1612
          %v1614 = vsub.f32 1.0, %v1613
          %v1615 = vmul.f32 %v1612, %v1614
          %v1616 = vadd.f32 %v1612, %v1615
          %vm1617 = vweird.f32 %v1578
          %vm1618 = vweird.f32 %v1612
          %vm1619 = vmor %vm1617, %vm1618
          %v1620 = vsel %vm1619, %v1612, %v1616
          %v1621 = vand.u32 2147483647, %v1578
          %vm1622 = vcmp.eq.f32.partialorder %v1621, 8.507059e+37
          %v1623 = vand.u32 %v1578, 2147483648
          %v1624 = vor.u32 1.1754944e-38, %v1623
          %v1625 = vsel %vm1622, %v1624, %v1620
          %v1626 = vmul.f32 1.0, %v1625
          %v1627 = vrcp.pop %v1579
          %v1628 = vmul.f32 %v1579, %v1627
          %v1629 = vsub.f32 1.0, %v1628
          %v1630 = vmul.f32 %v1627, %v1629
          %v1631 = vadd.f32 %v1627, %v1630
          %vm1632 = vweird.f32 %v1579
          %vm1633 = vweird.f32 %v1627
          %vm1634 = vmor %vm1632, %vm1633
          %v1635 = vsel %vm1634, %v1627, %v1631
          %v1636 = vand.u32 2147483647, %v1579
          %vm1637 = vcmp.eq.f32.partialorder %v1636, 8.507059e+37
          %v1638 = vand.u32 %v1579, 2147483648
          %v1639 = vor.u32 1.1754944e-38, %v1638
          %v1640 = vsel %vm1637, %v1639, %v1635
          %v1641 = vmul.f32 1.0, %v1640
          %v1642 = vrcp.pop %v1580
          %v1643 = vmul.f32 %v1580, %v1642
          %v1644 = vsub.f32 1.0, %v1643
          %v1645 = vmul.f32 %v1642, %v1644
          %v1646 = vadd.f32 %v1642, %v1645
          %vm1647 = vweird.f32 %v1580
          %vm1648 = vweird.f32 %v1642
          %vm1649 = vmor %vm1647, %vm1648
          %v1650 = vsel %vm1649, %v1642, %v1646
          %v1651 = vand.u32 2147483647, %v1580
          %vm1652 = vcmp.eq.f32.partialorder %v1651, 8.507059e+37
          %v1653 = vand.u32 %v1580, 2147483648
          %v1654 = vor.u32 1.1754944e-38, %v1653
          %v1655 = vsel %vm1652, %v1654, %v1650
          %v1656 = vmul.f32 1.0, %v1655
          %v1657 = vrcp.pop %v1581
          %v1658 = vmul.f32 %v1581, %v1657
          %v1659 = vsub.f32 1.0, %v1658
          %v1660 = vmul.f32 %v1657, %v1659
          %v1661 = vadd.f32 %v1657, %v1660
          %vm1662 = vweird.f32 %v1581
          %vm1663 = vweird.f32 %v1657
          %vm1664 = vmor %vm1662, %vm1663
          %v1665 = vsel %vm1664, %v1657, %v1661
          %v1666 = vand.u32 2147483647, %v1581
          %vm1667 = vcmp.eq.f32.partialorder %v1666, 8.507059e+37
          %v1668 = vand.u32 %v1581, 2147483648
          %v1669 = vor.u32 1.1754944e-38, %v1668
          %v1670 = vsel %vm1667, %v1669, %v1665
          %v1671 = vmul.f32 1.0, %v1670
          %v1678 = vrot.slane %v1611, 7
          %v1679 = vrot.slane %v1626, 6
          %v1680 = vrot.slane %v1641, 5
          %v1681 = vrot.slane %v1656, 4
          %v1682 = vrot.slane %v1671, 3
          %v1683 = vsel %vm719, %v1596, %v1678
          %v1684 = vsel %vm721, %v1683, %v1679
          %v1685 = vsel %vm723, %v1680, %v1681
          %v1686 = vsel %vm725, %v1685, %v1682
          %v1687 = vsel %vm727, %v1684, %v1686
          %v1689 = vmul.f32 %v1096, %v1687
          %v1690 = vld [vmem:[#allocation13] sm:$0x3f]
          %v1691 = vmul.f32 %v1689, %v1690
          %v1693 = vperm.slane %v1691, 0
          %v1694 = vperm.slane %v1691, 1
          %v1695 = vperm.slane %v1691, 2
          %v1696 = vperm.slane %v1691, 3
          %v1697 = vperm.slane %v1691, 4
          %v1698 = vperm.slane %v1691, 5
          %v1705 = vsel %vm719, %v1693, 0.0
          %v1706 = vsel %vm719, %v1694, 0.0
          %v1707 = vadd.f32 %v1705, %v1706
          %v1708 = vsel %vm719, %v1695, 0.0
          %v1709 = vadd.f32 %v1707, %v1708
          %v1710 = vsel %vm719, %v1696, 0.0
          %v1711 = vadd.f32 %v1709, %v1710
          %v1712 = vsel %vm719, %v1697, 0.0
          %v1713 = vadd.f32 %v1711, %v1712
          %v1714 = vsel %vm719, %v1698, 0.0
          %v1715 = vadd.f32 %v1713, %v1714
          %1716 = vadd.xlane.f32.xlu0 %v1715
          %v1717 = vpop.xlane.xlu0 %1716
          %v1718 = vld [vmem:[#allocation3] sm:$0x1]
          %v1719 = vadd.f32 %v1717, %v1718
          %v1720 = vxor.u32 %v1719, 2147483648
          %v1721 = vmul.f32 %v1720, 1.442695
          %v1722 = vpow.pop %v1721
          %v1723 = vadd.f32 %v1722, 1.0
          %v1724 = vrcp.pop %v1723
          %v1725 = vmul.f32 %v1723, %v1724
          %v1726 = vsub.f32 1.0, %v1725
          %v1727 = vmul.f32 %v1724, %v1726
          %v1728 = vadd.f32 %v1724, %v1727
          %vm1729 = vweird.f32 %v1723
          %vm1730 = vweird.f32 %v1724
          %vm1731 = vmor %vm1729, %vm1730
          %v1732 = vsel %vm1731, %v1724, %v1728
          %v1733 = vand.u32 2147483647, %v1723
          %vm1734 = vcmp.eq.f32.partialorder %v1733, 8.507059e+37
          %v1735 = vand.u32 %v1723, 2147483648
          %v1736 = vor.u32 1.1754944e-38, %v1735
          %v1737 = vsel %vm1734, %v1736, %v1732
          %v1738 = vmul.f32 1.0, %v1737
          %vm1739 = vcmask 0
          %1740 = vst.msk [vmem:[#allocation15] sm:$0x1] %vm1739, %v1738
        $region80: #{tpu_custom_call.1} parent=47 // pred_fallthru
          _
        // Predicated region
        $region81: #{tpu_custom_call.1} parent=47 // pred_check
          %p1741 = pneg %p192
        $region82: #{tpu_custom_call.1} parent=47 // pred_check_branch
          %1743 = sbr.rel (%p1741) target = $region84
        $region83: #{tpu_custom_call.1} parent=47 // pred_region
          %1745 = vsyncadd [#allocation6], 0
          %s1747 = sshll.u32 [#allocation15], 4
          %s1748 = int_to_ptr.vmem [resolvable:$true] %s1747
          %s1749 = sshll.u32 %s7, 4
          %s1750 = int_to_ptr.hbm [resolvable:$true] %s1749
          %1752 = dma.vmem_to_hbm [thread:$0]  %s1748, 16, %s1750, [#allocation6]
        $region84: #{tpu_custom_call.1} parent=47 // pred_fallthru
          _
        // Predicated region
        $region85: #{tpu_custom_call.1} parent=47 // pred_check
          %p1753 = pneg %p192
        $region86: #{tpu_custom_call.1} parent=47 // pred_check_branch
          %1755 = sbr.rel (%p1753) target = $region88
        $region87: #{tpu_custom_call.1} parent=47 // pred_region
          %1757 = dma.done [#allocation6], 16
        $region88: #{tpu_custom_call.1} parent=47 // pred_fallthru
          _
      $region48: #{tpu_custom_call.1} parent=5 // pred_fallthru
        _
      %p1758 = scmp.le.s32.totalorder 2, %s22
      // Predicated region
      $region89: #{tpu_custom_call.1} parent=5 // pred_check
        %p1759 = pneg %p1758
      $region90: #{tpu_custom_call.1} parent=5 // pred_check_branch
        %1761 = sbr.rel (%p1759) target = $region92
      $region91: #{tpu_custom_call.1} parent=5 // pred_region
        %s1762 = ssub.s32 %s22, 2
      $region92: #{tpu_custom_call.1} parent=5 // pred_fallthru
        _
    $region6: #{tpu_custom_call.1} parent=1 // loop_footer
      %s26 = sadd.s32 1, %s22
    $region7: #{tpu_custom_call.1} parent=1 // loop_footer_branch
      %21 = sbr.rel target = $region3
    $region8: #{tpu_custom_call.1} parent=1 // loop_exit
      _
    %1763 = vsyncpa [#allocation5], 1
    %s1764 = scalar_lea.sflag [#allocation5], 1
    %1765 = vsyncpa %s1764, 1
    %1766 = vsyncpa [#allocation8], 1
    %1767 = vsyncpa [#allocation11], 1
    %1768 = vsyncpa [#allocation14], 1
    %1769 = vsyncpa [#allocation6], 1
    %s1770 = scalar_lea.sflag [#allocation6], 1
    %1771 = vsyncpa %s1770, 1

</llo_original>
